<compile_context>
chip_gen: v5e
topology: v5e:2x2
jax: 0.10.0
libtpu: 0.0.40
codegen_flags: <defaults>
</compile_context>

<pallas_src>
import functools

import jax
import jax.numpy as jnp
from jax import lax
from jax.experimental import pallas as pl
from jax.experimental.pallas import tpu as pltpu


def _round_up(x, m):
    return (x + m - 1) // m * m


# -----------------------------------------------------------------------------
# Farthest point sampling (plain JAX; sequential, data dependent)
# -----------------------------------------------------------------------------
def _fps_single(xyz, length, num_groups, start_idx):
    # TODO(synk): sample_farthest_points is a sequential, data-dependent loop;
    # kept in plain JAX (no clean Pallas mapping).
    N = xyz.shape[0]
    valid = jnp.arange(N) < length

    def body(i, carry):
        min_d, selected = carry
        last = selected[i - 1]
        d = jnp.sum((xyz - xyz[last]) ** 2, axis=-1)
        min_d = jnp.minimum(min_d, d)
        nxt = jnp.argmax(jnp.where(valid, min_d, -jnp.inf))
        return min_d, selected.at[i].set(nxt.astype(jnp.int32))

    selected = jnp.zeros((num_groups,), jnp.int32).at[0].set(start_idx)
    min_d = jnp.full((N,), jnp.inf, jnp.float32)
    _, selected = lax.fori_loop(1, num_groups, body, (min_d, selected))
    return xyz[selected]


def _sample_group_centers(points, lengths, num_groups, start_key):
    B = points.shape[0]
    xyz = points[:, :, :3].astype(jnp.float32)

    def _start(k, l):
        return (jax.random.randint(k, (), 0, 2 ** 30) % l).astype(jnp.int32)

    starts = jax.vmap(_start)(jax.random.split(start_key, B), lengths)
    return jax.vmap(
        lambda x, l, s: _fps_single(x, l, num_groups, s))(xyz, lengths, starts)


# -----------------------------------------------------------------------------
# Kernel 1: fused ball query (radius + length mask) + top-K by energy
# -----------------------------------------------------------------------------
def _ball_topk_kernel(radius2, K, lengths_ref, pc_ref, cen_ref, idx_ref):
    b = pl.program_id(0)
    length = lengths_ref[b]              # scalar from SMEM prefetch
    pc = pc_ref[0]                       # (C, NGp): rows 0..2 xyz, row 3 energy
    cen = cen_ref[0]                     # (G, 3)
    G = cen.shape[0]
    NGp = pc.shape[1]

    # Squared distance on the VPU: d2[g, n] = sum_c (cen[g, c] - p[c, n])^2.
    d2 = None
    for c in range(3):
        diff = cen[:, c:c + 1] - pc[c:c + 1, :]          # (G,1)-(1,NGp) -> (G,NGp)
        sq = diff * diff
        d2 = sq if d2 is None else d2 + sq

    n_iota = lax.broadcasted_iota(jnp.int32, (G, NGp), 1)
    # length <= N also masks out the appended center / zero-pad columns.
    valid = (d2 <= radius2) & (n_iota < length)
    energy = pc[3:4, :]                                  # (1, NGp)
    score = jnp.where(valid, energy, -jnp.inf)           # (G, NGp)
    k_iota = lax.broadcasted_iota(jnp.int32, (G, K), 1)

    def body(k, carry):
        score, out = carry
        m = jnp.max(score, axis=-1, keepdims=True)                       # (G,1)
        sel = jnp.min(jnp.where(score == m, n_iota, NGp),
                      axis=-1, keepdims=True)                            # (G,1)
        idx_k = jnp.where(m > -jnp.inf, sel, -1)                         # (G,1)
        out = jnp.where(k_iota == k, idx_k, out)                         # (G,K)
        score = jnp.where(n_iota == sel, -jnp.inf, score)
        return score, out

    out0 = jnp.full((G, K), -1, jnp.int32)
    _, out = lax.fori_loop(0, K, body, (score, out0), unroll=True)
    idx_ref[0] = out


def ball_query_topk(pc, group_centers, lengths, radius, group_size):
    B, C, NGp = pc.shape
    G = group_centers.shape[1]
    kernel = functools.partial(_ball_topk_kernel,
                               float(radius) * float(radius), int(group_size))
    return pl.pallas_call(
        kernel,
        out_shape=jax.ShapeDtypeStruct((B, G, group_size), jnp.int32),
        grid_spec=pltpu.PrefetchScalarGridSpec(
            num_scalar_prefetch=1,
            grid=(B,),
            in_specs=[
                pl.BlockSpec((1, C, NGp), lambda b, lens: (b, 0, 0)),
                pl.BlockSpec((1, G, 3), lambda b, lens: (b, 0, 0)),
            ],
            out_specs=pl.BlockSpec((1, G, group_size), lambda b, lens: (b, 0, 0)),
        ),
        compiler_params=pltpu.CompilerParams(
            dimension_semantics=("parallel",)),
    )(lengths.astype(jnp.int32), pc, group_centers)


# -----------------------------------------------------------------------------
# Kernel 2: lane-dense gather + center subtraction + radius normalization
# -----------------------------------------------------------------------------
def _gather_center_kernel(N, TILE, inv_radius, aux_ref, pc_ref, out_ref, acc_ref):
    t = pl.program_id(1)

    @pl.when(t == 0)
    def _():
        acc_ref[...] = jnp.zeros_like(acc_ref)

    aux = aux_ref[0]                     # (2, GK) int32
    idxv = aux[0:1, :]                   # (1, GK) gathered point index per column
    gidv = aux[1:2, :]                   # (1, GK) group id per column
    GK = idxv.shape[1]

    r = lax.broadcasted_iota(jnp.int32, (TILE, GK), 0) + t * TILE
    # rows [0, N): +1 where the row is the gathered point;
    # rows [N, N+G): -1 where the row is that column's group center;
    # zero-pad rows contribute 0 (idxv < N and gidv < G make the gates implicit).
    onehot = ((r == idxv).astype(jnp.float32)
              - ((r - N) == gidv).astype(jnp.float32))
    acc_ref[...] += jnp.dot(pc_ref[0], onehot,
                            preferred_element_type=jnp.float32)

    @pl.when(t == pl.num_programs(1) - 1)
    def _():
        C = acc_ref.shape[0]
        ch = lax.broadcasted_iota(jnp.int32, (C, 1), 0)
        scale = jnp.where(ch < 3, inv_radius, 1.0)       # xyz rows scaled by 1/r
        out_ref[0] = acc_ref[...] * scale


def gather_groups(pc, aux, num_groups, group_size, N, tile, radius):
    B, C, NGp = pc.shape
    GK = num_groups * group_size
    NT = NGp // tile
    inv_r = 1.0 / float(radius)
    kernel = functools.partial(_gather_center_kernel, int(N), int(tile), inv_r)
    return pl.pallas_call(
        kernel,
        out_shape=jax.ShapeDtypeStruct((B, C, GK), jnp.float32),
        grid=(B, NT),
        in_specs=[
            pl.BlockSpec((1, 2, GK), lambda b, t: (b, 0, 0)),
            pl.BlockSpec((1, C, tile), lambda b, t: (b, 0, t)),
        ],
        out_specs=pl.BlockSpec((1, C, GK), lambda b, t: (b, 0, 0)),
        scratch_shapes=[pltpu.VMEM((C, GK), jnp.float32)],
        compiler_params=pltpu.CompilerParams(
            dimension_semantics=("parallel", "arbitrary")),
    )(aux, pc)


# -----------------------------------------------------------------------------
# Wrapper / plain-JAX glue
# -----------------------------------------------------------------------------
def _build_pc(points, group_centers):
    """Channels-in-sublanes slab: [points^T | centers^T (energy=0) | zero pad]."""
    B, N, C = points.shape
    G = group_centers.shape[1]
    pts_t = jnp.transpose(points.astype(jnp.float32), (0, 2, 1))         # (B, C, N)
    cen_t = jnp.transpose(group_centers, (0, 2, 1))                      # (B, 3, G)
    cen_aug = jnp.concatenate(
        [cen_t, jnp.zeros((B, C - 3, G), jnp.float32)], axis=1)          # (B, C, G)
    NG = N + G
    if NG <= 512:
        NGp = _round_up(NG, 128)
        tile = NGp
    else:
        NGp = _round_up(NG, 512)
        tile = 512
    pad = jnp.zeros((B, C, NGp - NG), jnp.float32)
    pc = jnp.concatenate([pts_t, cen_aug, pad], axis=2)                  # (B, C, NGp)
    return pc, tile


def pointcloud_grouping_forward(points, lengths, *, num_groups, group_size,
                                group_radius, context_length, start_key):
    # TODO(synk): knn_points branch (group_radius=None) not implemented; only
    # the ball-query path (with upscale_group_size >= N) is covered.
    B, N, C = points.shape
    G, K = num_groups, group_size
    GK = G * K

    # farthest point sampling with a deterministic random start per batch
    group_centers = _sample_group_centers(points, lengths, G, start_key)  # (B,G,3)

    # TODO(synk): cnms (overlap-based center NMS) is an external, undefined op;
    # the overlap_factor=None branch (lengths1=None) is implemented here.

    pc, tile = _build_pc(points, group_centers)                           # (B,C,NGp)

    # Kernel 1: fused ball query + top-K by energy -> selected point indices.
    idx = ball_query_topk(pc, group_centers, lengths, group_radius, K)    # (B,G,K)

    point_lengths = jnp.sum(idx != -1, axis=2)                            # (B,G)

    # fill_empty_indices + masked_gather's clamp of remaining -1 to 0
    first = idx[:, :, :1]
    idx_filled = jnp.where(idx == -1, jnp.broadcast_to(first, idx.shape), idx)
    idx_gather = jnp.maximum(idx_filled, 0).reshape(B, 1, GK)
    gid = jnp.broadcast_to(
        (jnp.arange(GK, dtype=jnp.int32) // K)[None, None, :], (B, 1, GK))
    aux = jnp.concatenate([idx_gather, gid], axis=1).astype(jnp.int32)    # (B,2,GK)

    # Kernel 2: gather + center subtraction + radius normalization (lane dense).
    groups_t = gather_groups(pc, aux, G, K, N, tile, group_radius)        # (B,C,GK)
    groups = jnp.transpose(groups_t.reshape(B, C, G, K), (0, 2, 3, 1))    # (B,G,K,C)

    point_mask = (jnp.arange(K)[None, None, :]
                  < point_lengths[:, :context_length, None])              # (B,ctx,K)
    # NOTE: the reference computes group_lengths AFTER fill_empty_indices
    # mutated idx in place; replicate that with idx_filled.
    group_lengths = jnp.sum(jnp.all(idx_filled != -1, axis=2), axis=1)    # (B,)
    embedding_mask = jnp.arange(G)[None, :] < group_lengths[:, None]

    groups = groups[:, :context_length]
    group_centers_out = group_centers[:, :context_length]
    embedding_mask = embedding_mask[:, :context_length]
    # TODO(synk): semantic_id gather path not exercised (semantic_id is None).
    semantic_id_groups = None
    return groups, group_centers_out, embedding_mask, point_mask, semantic_id_groups


# -----------------------------------------------------------------------------
# Pure-JAX reference (same group centers) for a correctness cross-check
# -----------------------------------------------------------------------------
def _reference_forward(points, lengths, group_centers, *, group_size,
                       group_radius, context_length):
    B, N, C = points.shape
    G = group_centers.shape[1]
    xyz = points[:, :, :3]
    d2 = jnp.sum((group_centers[:, :, None, :] - xyz[:, None, :, :]) ** 2, -1)
    valid = ((d2 <= group_radius * group_radius)
             & (jnp.arange(N)[None, None, :] < lengths[:, None, None]))
    score = jnp.where(valid, points[:, None, :, 3], -jnp.inf)
    vals, nn = lax.top_k(score, group_size)
    idx = jnp.where(vals == -jnp.inf, -1, nn.astype(jnp.int32))
    point_lengths = jnp.sum(idx != -1, axis=2)
    first = idx[:, :, :1]
    idx_filled = jnp.where(idx == -1, jnp.broadcast_to(first, idx.shape), idx)
    gidx = jnp.maximum(idx_filled, 0)
    gathered = jax.vmap(lambda p, i: p[i])(points, gidx)                  # (B,G,K,C)
    xyz_rel = (gathered[..., :3] - group_centers[:, :, None, :]) * (1.0 / group_radius)
    groups = jnp.concatenate([xyz_rel, gathered[..., 3:]], axis=-1)
    point_mask = (jnp.arange(group_size)[None, None, :]
                  < point_lengths[:, :context_length, None])
    group_lengths = jnp.sum(jnp.all(idx_filled != -1, axis=2), axis=1)
    embedding_mask = jnp.arange(G)[None, :] < group_lengths[:, None]
    return (groups[:, :context_length], point_mask,
            embedding_mask[:, :context_length])


if __name__ == "__main__":
    key = jax.random.PRNGKey(0)
    k_pts, k_e, k_start = jax.random.split(key, 3)

    B, N, C = 2, 64, 4                 # channels = (x, y, z, energy)
    num_groups, group_size = 16, 16    # G, K
    group_radius = 0.5
    context_length = 8                 # exercises the [:, :context_length] slice

    xyz = jax.random.uniform(k_pts, (B, N, 3), jnp.float32)
    energy = jax.random.uniform(k_e, (B, N, 1), jnp.float32)
    points = jnp.concatenate([xyz, energy], -1)
    lengths = jnp.array([64, 48], jnp.int32)

    groups, centers, emb_mask, pt_mask, sem = pointcloud_grouping_forward(
        points, lengths,
        num_groups=num_groups, group_size=group_size,
        group_radius=group_radius, context_length=context_length,
        start_key=k_start)
    jax.block_until_ready((groups, centers, emb_mask, pt_mask))

    assert groups.shape == (B, context_length, group_size, C)
    assert centers.shape == (B, context_length, 3)
    assert emb_mask.shape == (B, context_length) and emb_mask.dtype == jnp.bool_
    assert pt_mask.shape == (B, context_length, group_size) and pt_mask.dtype == jnp.bool_
    assert sem is None
    assert bool(jnp.all(jnp.isfinite(groups)))

    # cross-check against a pure-JAX reference using the same FPS centers
    full_centers = _sample_group_centers(points, lengths, num_groups, k_start)
    groups_ref, pt_mask_ref, emb_mask_ref = _reference_forward(
        points, lengths, full_centers, group_size=group_size,
        group_radius=group_radius, context_length=context_length)
    assert bool(jnp.allclose(groups, groups_ref, rtol=1e-5, atol=1e-5))
    assert bool(jnp.array_equal(pt_mask, pt_mask_ref))
    assert bool(jnp.array_equal(emb_mask, emb_mask_ref))

    print("KERNEL_OK")
</pallas_src>

<mosaic_0001>
module attributes {stable_mosaic.version = 11 : i64} {
  func.func @_ball_topk_kernel(%arg0: i32, %arg1: memref<2xi32, #tpu.memory_space<smem>>, %arg2: memref<1x4x128xf32, #tpu.memory_space<vmem>>, %arg3: memref<1x16x3xf32, #tpu.memory_space<vmem>>, %arg4: memref<1x16x16xi32, #tpu.memory_space<vmem>>) attributes {dimension_semantics = [#tpu.dimension_semantics<parallel>], iteration_bounds = array<i64: 2>, scalar_prefetch = 1 : i64, scratch_operands = 0 : i64, tpu.core_type = #tpu.core_type<tc>, window_params = [{transform_indices = @transform_0, window_bounds = array<i64: 1, 4, 128>}, {transform_indices = @transform_1, window_bounds = array<i64: 1, 16, 3>}, {transform_indices = @transform_2, window_bounds = array<i64: 1, 16, 16>}]} {
    %0 = arith.index_cast %arg0 : i32 to index
    %1 = memref.load %arg1[%0] : memref<2xi32, #tpu.memory_space<smem>>
    %c0 = arith.constant 0 : index
    %c0_0 = arith.constant 0 : index
    %c0_1 = arith.constant 0 : index
    %2 = vector.load %arg2[%c0, %c0_0, %c0_1] : memref<1x4x128xf32, #tpu.memory_space<vmem>>, vector<1x4x128xf32>
    %3 = vector.shape_cast %2 : vector<1x4x128xf32> to vector<4x128xf32>
    %c0_2 = arith.constant 0 : index
    %c0_3 = arith.constant 0 : index
    %c0_4 = arith.constant 0 : index
    %4 = vector.load %arg3[%c0_2, %c0_3, %c0_4] : memref<1x16x3xf32, #tpu.memory_space<vmem>>, vector<1x16x3xf32>
    %5 = vector.shape_cast %4 : vector<1x16x3xf32> to vector<16x3xf32>
    %6 = vector.extract_strided_slice %5 {offsets = [0, 0], sizes = [16, 1], strides = [1, 1]} : vector<16x3xf32> to vector<16x1xf32>
    %7 = vector.extract_strided_slice %3 {offsets = [0, 0], sizes = [1, 128], strides = [1, 1]} : vector<4x128xf32> to vector<1x128xf32>
    %8 = vector.broadcast %6 : vector<16x1xf32> to vector<16x128xf32>
    %9 = vector.broadcast %7 : vector<1x128xf32> to vector<16x128xf32>
    %10 = arith.subf %8, %9 : vector<16x128xf32>
    %11 = arith.mulf %10, %10 : vector<16x128xf32>
    %12 = vector.extract_strided_slice %5 {offsets = [0, 1], sizes = [16, 1], strides = [1, 1]} : vector<16x3xf32> to vector<16x1xf32>
    %13 = vector.extract_strided_slice %3 {offsets = [1, 0], sizes = [1, 128], strides = [1, 1]} : vector<4x128xf32> to vector<1x128xf32>
    %14 = vector.broadcast %12 : vector<16x1xf32> to vector<16x128xf32>
    %15 = vector.broadcast %13 : vector<1x128xf32> to vector<16x128xf32>
    %16 = arith.subf %14, %15 : vector<16x128xf32>
    %17 = arith.mulf %16, %16 : vector<16x128xf32>
    %18 = arith.addf %11, %17 : vector<16x128xf32>
    %19 = vector.extract_strided_slice %5 {offsets = [0, 2], sizes = [16, 1], strides = [1, 1]} : vector<16x3xf32> to vector<16x1xf32>
    %20 = vector.extract_strided_slice %3 {offsets = [2, 0], sizes = [1, 128], strides = [1, 1]} : vector<4x128xf32> to vector<1x128xf32>
    %21 = vector.broadcast %19 : vector<16x1xf32> to vector<16x128xf32>
    %22 = vector.broadcast %20 : vector<1x128xf32> to vector<16x128xf32>
    %23 = arith.subf %21, %22 : vector<16x128xf32>
    %24 = arith.mulf %23, %23 : vector<16x128xf32>
    %25 = arith.addf %18, %24 : vector<16x128xf32>
    %26 = tpu.iota {dimensions = array<i32: 1>} : vector<16x128xi32>
    %cst = arith.constant 2.500000e-01 : f32
    %27 = vector.broadcast %cst : f32 to vector<16x128xf32>
    %28 = arith.cmpf ole, %25, %27 : vector<16x128xf32>
    %29 = vector.broadcast %1 : i32 to vector<16x128xi32>
    %30 = arith.cmpi slt, %26, %29 : vector<16x128xi32>
    %31 = arith.andi %28, %30 : vector<16x128xi1>
    %32 = vector.extract_strided_slice %3 {offsets = [3, 0], sizes = [1, 128], strides = [1, 1]} : vector<4x128xf32> to vector<1x128xf32>
    %cst_5 = arith.constant 0xFF800000 : f32
    %33 = vector.shape_cast %32 : vector<1x128xf32> to vector<1x128xf32>
    %34 = vector.broadcast %33 : vector<1x128xf32> to vector<16x128xf32>
    %35 = vector.broadcast %cst_5 : f32 to vector<16x128xf32>
    %36 = arith.select %31, %34, %35 : vector<16x128xi1>, vector<16x128xf32>
    %37 = tpu.iota {dimensions = array<i32: 1>} : vector<16x16xi32>
    %c-1_i32 = arith.constant -1 : i32
    %38 = vector.broadcast %c-1_i32 : i32 to vector<16x16xi32>
    %c0_i32 = arith.constant 0 : i32
    %cst_6 = arith.constant dense<0xFF800000> : vector<16xf32>
    %39 = vector.multi_reduction <maximumf>, %36, %cst_6 [1] : vector<16x128xf32> to vector<16xf32>
    %40 = vector.shape_cast %39 : vector<16xf32> to vector<16x1xf32>
    %41 = vector.broadcast %40 : vector<16x1xf32> to vector<16x128xf32>
    %42 = arith.cmpf oeq, %36, %41 : vector<16x128xf32>
    %c128_i32 = arith.constant 128 : i32
    %43 = vector.broadcast %c128_i32 : i32 to vector<16x128xi32>
    %44 = arith.select %42, %26, %43 : vector<16x128xi1>, vector<16x128xi32>
    %cst_7 = arith.constant dense<2147483647> : vector<16xi32>
    %45 = vector.multi_reduction <minsi>, %44, %cst_7 [1] : vector<16x128xi32> to vector<16xi32>
    %46 = vector.shape_cast %45 : vector<16xi32> to vector<16x1xi32>
    %cst_8 = arith.constant 0xFF800000 : f32
    %47 = vector.broadcast %cst_8 : f32 to vector<16x1xf32>
    %48 = arith.cmpf ogt, %40, %47 : vector<16x1xf32>
    %c-1_i32_9 = arith.constant -1 : i32
    %49 = vector.broadcast %c-1_i32_9 : i32 to vector<16x1xi32>
    %50 = arith.select %48, %46, %49 : vector<16x1xi1>, vector<16x1xi32>
    %51 = vector.broadcast %c0_i32 : i32 to vector<16x16xi32>
    %52 = arith.cmpi eq, %37, %51 : vector<16x16xi32>
    %53 = vector.shape_cast %50 : vector<16x1xi32> to vector<16x1xi32>
    %54 = vector.broadcast %53 : vector<16x1xi32> to vector<16x16xi32>
    %55 = arith.select %52, %54, %38 : vector<16x16xi1>, vector<16x16xi32>
    %56 = vector.broadcast %46 : vector<16x1xi32> to vector<16x128xi32>
    %57 = arith.cmpi eq, %26, %56 : vector<16x128xi32>
    %cst_10 = arith.constant 0xFF800000 : f32
    %58 = vector.broadcast %cst_10 : f32 to vector<16x128xf32>
    %59 = arith.select %57, %58, %36 : vector<16x128xi1>, vector<16x128xf32>
    %c1_i32 = arith.constant 1 : i32
    %cst_11 = arith.constant dense<0xFF800000> : vector<16xf32>
    %60 = vector.multi_reduction <maximumf>, %59, %cst_11 [1] : vector<16x128xf32> to vector<16xf32>
    %61 = vector.shape_cast %60 : vector<16xf32> to vector<16x1xf32>
    %62 = vector.broadcast %61 : vector<16x1xf32> to vector<16x128xf32>
    %63 = arith.cmpf oeq, %59, %62 : vector<16x128xf32>
    %c128_i32_12 = arith.constant 128 : i32
    %64 = vector.broadcast %c128_i32_12 : i32 to vector<16x128xi32>
    %65 = arith.select %63, %26, %64 : vector<16x128xi1>, vector<16x128xi32>
    %cst_13 = arith.constant dense<2147483647> : vector<16xi32>
    %66 = vector.multi_reduction <minsi>, %65, %cst_13 [1] : vector<16x128xi32> to vector<16xi32>
    %67 = vector.shape_cast %66 : vector<16xi32> to vector<16x1xi32>
    %cst_14 = arith.constant 0xFF800000 : f32
    %68 = vector.broadcast %cst_14 : f32 to vector<16x1xf32>
    %69 = arith.cmpf ogt, %61, %68 : vector<16x1xf32>
    %c-1_i32_15 = arith.constant -1 : i32
    %70 = vector.broadcast %c-1_i32_15 : i32 to vector<16x1xi32>
    %71 = arith.select %69, %67, %70 : vector<16x1xi1>, vector<16x1xi32>
    %72 = vector.broadcast %c1_i32 : i32 to vector<16x16xi32>
    %73 = arith.cmpi eq, %37, %72 : vector<16x16xi32>
    %74 = vector.shape_cast %71 : vector<16x1xi32> to vector<16x1xi32>
    %75 = vector.broadcast %74 : vector<16x1xi32> to vector<16x16xi32>
    %76 = arith.select %73, %75, %55 : vector<16x16xi1>, vector<16x16xi32>
    %77 = vector.broadcast %67 : vector<16x1xi32> to vector<16x128xi32>
    %78 = arith.cmpi eq, %26, %77 : vector<16x128xi32>
    %cst_16 = arith.constant 0xFF800000 : f32
    %79 = vector.broadcast %cst_16 : f32 to vector<16x128xf32>
    %80 = arith.select %78, %79, %59 : vector<16x128xi1>, vector<16x128xf32>
    %c2_i32 = arith.constant 2 : i32
    %cst_17 = arith.constant dense<0xFF800000> : vector<16xf32>
    %81 = vector.multi_reduction <maximumf>, %80, %cst_17 [1] : vector<16x128xf32> to vector<16xf32>
    %82 = vector.shape_cast %81 : vector<16xf32> to vector<16x1xf32>
    %83 = vector.broadcast %82 : vector<16x1xf32> to vector<16x128xf32>
    %84 = arith.cmpf oeq, %80, %83 : vector<16x128xf32>
    %c128_i32_18 = arith.constant 128 : i32
    %85 = vector.broadcast %c128_i32_18 : i32 to vector<16x128xi32>
    %86 = arith.select %84, %26, %85 : vector<16x128xi1>, vector<16x128xi32>
    %cst_19 = arith.constant dense<2147483647> : vector<16xi32>
    %87 = vector.multi_reduction <minsi>, %86, %cst_19 [1] : vector<16x128xi32> to vector<16xi32>
    %88 = vector.shape_cast %87 : vector<16xi32> to vector<16x1xi32>
    %cst_20 = arith.constant 0xFF800000 : f32
    %89 = vector.broadcast %cst_20 : f32 to vector<16x1xf32>
    %90 = arith.cmpf ogt, %82, %89 : vector<16x1xf32>
    %c-1_i32_21 = arith.constant -1 : i32
    %91 = vector.broadcast %c-1_i32_21 : i32 to vector<16x1xi32>
    %92 = arith.select %90, %88, %91 : vector<16x1xi1>, vector<16x1xi32>
    %93 = vector.broadcast %c2_i32 : i32 to vector<16x16xi32>
    %94 = arith.cmpi eq, %37, %93 : vector<16x16xi32>
    %95 = vector.shape_cast %92 : vector<16x1xi32> to vector<16x1xi32>
    %96 = vector.broadcast %95 : vector<16x1xi32> to vector<16x16xi32>
    %97 = arith.select %94, %96, %76 : vector<16x16xi1>, vector<16x16xi32>
    %98 = vector.broadcast %88 : vector<16x1xi32> to vector<16x128xi32>
    %99 = arith.cmpi eq, %26, %98 : vector<16x128xi32>
    %cst_22 = arith.constant 0xFF800000 : f32
    %100 = vector.broadcast %cst_22 : f32 to vector<16x128xf32>
    %101 = arith.select %99, %100, %80 : vector<16x128xi1>, vector<16x128xf32>
    %c3_i32 = arith.constant 3 : i32
    %cst_23 = arith.constant dense<0xFF800000> : vector<16xf32>
    %102 = vector.multi_reduction <maximumf>, %101, %cst_23 [1] : vector<16x128xf32> to vector<16xf32>
    %103 = vector.shape_cast %102 : vector<16xf32> to vector<16x1xf32>
    %104 = vector.broadcast %103 : vector<16x1xf32> to vector<16x128xf32>
    %105 = arith.cmpf oeq, %101, %104 : vector<16x128xf32>
    %c128_i32_24 = arith.constant 128 : i32
    %106 = vector.broadcast %c128_i32_24 : i32 to vector<16x128xi32>
    %107 = arith.select %105, %26, %106 : vector<16x128xi1>, vector<16x128xi32>
    %cst_25 = arith.constant dense<2147483647> : vector<16xi32>
    %108 = vector.multi_reduction <minsi>, %107, %cst_25 [1] : vector<16x128xi32> to vector<16xi32>
    %109 = vector.shape_cast %108 : vector<16xi32> to vector<16x1xi32>
    %cst_26 = arith.constant 0xFF800000 : f32
    %110 = vector.broadcast %cst_26 : f32 to vector<16x1xf32>
    %111 = arith.cmpf ogt, %103, %110 : vector<16x1xf32>
    %c-1_i32_27 = arith.constant -1 : i32
    %112 = vector.broadcast %c-1_i32_27 : i32 to vector<16x1xi32>
    %113 = arith.select %111, %109, %112 : vector<16x1xi1>, vector<16x1xi32>
    %114 = vector.broadcast %c3_i32 : i32 to vector<16x16xi32>
    %115 = arith.cmpi eq, %37, %114 : vector<16x16xi32>
    %116 = vector.shape_cast %113 : vector<16x1xi32> to vector<16x1xi32>
    %117 = vector.broadcast %116 : vector<16x1xi32> to vector<16x16xi32>
    %118 = arith.select %115, %117, %97 : vector<16x16xi1>, vector<16x16xi32>
    %119 = vector.broadcast %109 : vector<16x1xi32> to vector<16x128xi32>
    %120 = arith.cmpi eq, %26, %119 : vector<16x128xi32>
    %cst_28 = arith.constant 0xFF800000 : f32
    %121 = vector.broadcast %cst_28 : f32 to vector<16x128xf32>
    %122 = arith.select %120, %121, %101 : vector<16x128xi1>, vector<16x128xf32>
    %c4_i32 = arith.constant 4 : i32
    %cst_29 = arith.constant dense<0xFF800000> : vector<16xf32>
    %123 = vector.multi_reduction <maximumf>, %122, %cst_29 [1] : vector<16x128xf32> to vector<16xf32>
    %124 = vector.shape_cast %123 : vector<16xf32> to vector<16x1xf32>
    %125 = vector.broadcast %124 : vector<16x1xf32> to vector<16x128xf32>
    %126 = arith.cmpf oeq, %122, %125 : vector<16x128xf32>
    %c128_i32_30 = arith.constant 128 : i32
    %127 = vector.broadcast %c128_i32_30 : i32 to vector<16x128xi32>
    %128 = arith.select %126, %26, %127 : vector<16x128xi1>, vector<16x128xi32>
    %cst_31 = arith.constant dense<2147483647> : vector<16xi32>
    %129 = vector.multi_reduction <minsi>, %128, %cst_31 [1] : vector<16x128xi32> to vector<16xi32>
    %130 = vector.shape_cast %129 : vector<16xi32> to vector<16x1xi32>
    %cst_32 = arith.constant 0xFF800000 : f32
    %131 = vector.broadcast %cst_32 : f32 to vector<16x1xf32>
    %132 = arith.cmpf ogt, %124, %131 : vector<16x1xf32>
    %c-1_i32_33 = arith.constant -1 : i32
    %133 = vector.broadcast %c-1_i32_33 : i32 to vector<16x1xi32>
    %134 = arith.select %132, %130, %133 : vector<16x1xi1>, vector<16x1xi32>
    %135 = vector.broadcast %c4_i32 : i32 to vector<16x16xi32>
    %136 = arith.cmpi eq, %37, %135 : vector<16x16xi32>
    %137 = vector.shape_cast %134 : vector<16x1xi32> to vector<16x1xi32>
    %138 = vector.broadcast %137 : vector<16x1xi32> to vector<16x16xi32>
    %139 = arith.select %136, %138, %118 : vector<16x16xi1>, vector<16x16xi32>
    %140 = vector.broadcast %130 : vector<16x1xi32> to vector<16x128xi32>
    %141 = arith.cmpi eq, %26, %140 : vector<16x128xi32>
    %cst_34 = arith.constant 0xFF800000 : f32
    %142 = vector.broadcast %cst_34 : f32 to vector<16x128xf32>
    %143 = arith.select %141, %142, %122 : vector<16x128xi1>, vector<16x128xf32>
    %c5_i32 = arith.constant 5 : i32
    %cst_35 = arith.constant dense<0xFF800000> : vector<16xf32>
    %144 = vector.multi_reduction <maximumf>, %143, %cst_35 [1] : vector<16x128xf32> to vector<16xf32>
    %145 = vector.shape_cast %144 : vector<16xf32> to vector<16x1xf32>
    %146 = vector.broadcast %145 : vector<16x1xf32> to vector<16x128xf32>
    %147 = arith.cmpf oeq, %143, %146 : vector<16x128xf32>
    %c128_i32_36 = arith.constant 128 : i32
    %148 = vector.broadcast %c128_i32_36 : i32 to vector<16x128xi32>
    %149 = arith.select %147, %26, %148 : vector<16x128xi1>, vector<16x128xi32>
    %cst_37 = arith.constant dense<2147483647> : vector<16xi32>
    %150 = vector.multi_reduction <minsi>, %149, %cst_37 [1] : vector<16x128xi32> to vector<16xi32>
    %151 = vector.shape_cast %150 : vector<16xi32> to vector<16x1xi32>
    %cst_38 = arith.constant 0xFF800000 : f32
    %152 = vector.broadcast %cst_38 : f32 to vector<16x1xf32>
    %153 = arith.cmpf ogt, %145, %152 : vector<16x1xf32>
    %c-1_i32_39 = arith.constant -1 : i32
    %154 = vector.broadcast %c-1_i32_39 : i32 to vector<16x1xi32>
    %155 = arith.select %153, %151, %154 : vector<16x1xi1>, vector<16x1xi32>
    %156 = vector.broadcast %c5_i32 : i32 to vector<16x16xi32>
    %157 = arith.cmpi eq, %37, %156 : vector<16x16xi32>
    %158 = vector.shape_cast %155 : vector<16x1xi32> to vector<16x1xi32>
    %159 = vector.broadcast %158 : vector<16x1xi32> to vector<16x16xi32>
    %160 = arith.select %157, %159, %139 : vector<16x16xi1>, vector<16x16xi32>
    %161 = vector.broadcast %151 : vector<16x1xi32> to vector<16x128xi32>
    %162 = arith.cmpi eq, %26, %161 : vector<16x128xi32>
    %cst_40 = arith.constant 0xFF800000 : f32
    %163 = vector.broadcast %cst_40 : f32 to vector<16x128xf32>
    %164 = arith.select %162, %163, %143 : vector<16x128xi1>, vector<16x128xf32>
    %c6_i32 = arith.constant 6 : i32
    %cst_41 = arith.constant dense<0xFF800000> : vector<16xf32>
    %165 = vector.multi_reduction <maximumf>, %164, %cst_41 [1] : vector<16x128xf32> to vector<16xf32>
    %166 = vector.shape_cast %165 : vector<16xf32> to vector<16x1xf32>
    %167 = vector.broadcast %166 : vector<16x1xf32> to vector<16x128xf32>
    %168 = arith.cmpf oeq, %164, %167 : vector<16x128xf32>
    %c128_i32_42 = arith.constant 128 : i32
    %169 = vector.broadcast %c128_i32_42 : i32 to vector<16x128xi32>
    %170 = arith.select %168, %26, %169 : vector<16x128xi1>, vector<16x128xi32>
    %cst_43 = arith.constant dense<2147483647> : vector<16xi32>
    %171 = vector.multi_reduction <minsi>, %170, %cst_43 [1] : vector<16x128xi32> to vector<16xi32>
    %172 = vector.shape_cast %171 : vector<16xi32> to vector<16x1xi32>
    %cst_44 = arith.constant 0xFF800000 : f32
    %173 = vector.broadcast %cst_44 : f32 to vector<16x1xf32>
    %174 = arith.cmpf ogt, %166, %173 : vector<16x1xf32>
    %c-1_i32_45 = arith.constant -1 : i32
    %175 = vector.broadcast %c-1_i32_45 : i32 to vector<16x1xi32>
    %176 = arith.select %174, %172, %175 : vector<16x1xi1>, vector<16x1xi32>
    %177 = vector.broadcast %c6_i32 : i32 to vector<16x16xi32>
    %178 = arith.cmpi eq, %37, %177 : vector<16x16xi32>
    %179 = vector.shape_cast %176 : vector<16x1xi32> to vector<16x1xi32>
    %180 = vector.broadcast %179 : vector<16x1xi32> to vector<16x16xi32>
    %181 = arith.select %178, %180, %160 : vector<16x16xi1>, vector<16x16xi32>
    %182 = vector.broadcast %172 : vector<16x1xi32> to vector<16x128xi32>
    %183 = arith.cmpi eq, %26, %182 : vector<16x128xi32>
    %cst_46 = arith.constant 0xFF800000 : f32
    %184 = vector.broadcast %cst_46 : f32 to vector<16x128xf32>
    %185 = arith.select %183, %184, %164 : vector<16x128xi1>, vector<16x128xf32>
    %c7_i32 = arith.constant 7 : i32
    %cst_47 = arith.constant dense<0xFF800000> : vector<16xf32>
    %186 = vector.multi_reduction <maximumf>, %185, %cst_47 [1] : vector<16x128xf32> to vector<16xf32>
    %187 = vector.shape_cast %186 : vector<16xf32> to vector<16x1xf32>
    %188 = vector.broadcast %187 : vector<16x1xf32> to vector<16x128xf32>
    %189 = arith.cmpf oeq, %185, %188 : vector<16x128xf32>
    %c128_i32_48 = arith.constant 128 : i32
    %190 = vector.broadcast %c128_i32_48 : i32 to vector<16x128xi32>
    %191 = arith.select %189, %26, %190 : vector<16x128xi1>, vector<16x128xi32>
    %cst_49 = arith.constant dense<2147483647> : vector<16xi32>
    %192 = vector.multi_reduction <minsi>, %191, %cst_49 [1] : vector<16x128xi32> to vector<16xi32>
    %193 = vector.shape_cast %192 : vector<16xi32> to vector<16x1xi32>
    %cst_50 = arith.constant 0xFF800000 : f32
    %194 = vector.broadcast %cst_50 : f32 to vector<16x1xf32>
    %195 = arith.cmpf ogt, %187, %194 : vector<16x1xf32>
    %c-1_i32_51 = arith.constant -1 : i32
    %196 = vector.broadcast %c-1_i32_51 : i32 to vector<16x1xi32>
    %197 = arith.select %195, %193, %196 : vector<16x1xi1>, vector<16x1xi32>
    %198 = vector.broadcast %c7_i32 : i32 to vector<16x16xi32>
    %199 = arith.cmpi eq, %37, %198 : vector<16x16xi32>
    %200 = vector.shape_cast %197 : vector<16x1xi32> to vector<16x1xi32>
    %201 = vector.broadcast %200 : vector<16x1xi32> to vector<16x16xi32>
    %202 = arith.select %199, %201, %181 : vector<16x16xi1>, vector<16x16xi32>
    %203 = vector.broadcast %193 : vector<16x1xi32> to vector<16x128xi32>
    %204 = arith.cmpi eq, %26, %203 : vector<16x128xi32>
    %cst_52 = arith.constant 0xFF800000 : f32
    %205 = vector.broadcast %cst_52 : f32 to vector<16x128xf32>
    %206 = arith.select %204, %205, %185 : vector<16x128xi1>, vector<16x128xf32>
    %c8_i32 = arith.constant 8 : i32
    %cst_53 = arith.constant dense<0xFF800000> : vector<16xf32>
    %207 = vector.multi_reduction <maximumf>, %206, %cst_53 [1] : vector<16x128xf32> to vector<16xf32>
    %208 = vector.shape_cast %207 : vector<16xf32> to vector<16x1xf32>
    %209 = vector.broadcast %208 : vector<16x1xf32> to vector<16x128xf32>
    %210 = arith.cmpf oeq, %206, %209 : vector<16x128xf32>
    %c128_i32_54 = arith.constant 128 : i32
    %211 = vector.broadcast %c128_i32_54 : i32 to vector<16x128xi32>
    %212 = arith.select %210, %26, %211 : vector<16x128xi1>, vector<16x128xi32>
    %cst_55 = arith.constant dense<2147483647> : vector<16xi32>
    %213 = vector.multi_reduction <minsi>, %212, %cst_55 [1] : vector<16x128xi32> to vector<16xi32>
    %214 = vector.shape_cast %213 : vector<16xi32> to vector<16x1xi32>
    %cst_56 = arith.constant 0xFF800000 : f32
    %215 = vector.broadcast %cst_56 : f32 to vector<16x1xf32>
    %216 = arith.cmpf ogt, %208, %215 : vector<16x1xf32>
    %c-1_i32_57 = arith.constant -1 : i32
    %217 = vector.broadcast %c-1_i32_57 : i32 to vector<16x1xi32>
    %218 = arith.select %216, %214, %217 : vector<16x1xi1>, vector<16x1xi32>
    %219 = vector.broadcast %c8_i32 : i32 to vector<16x16xi32>
    %220 = arith.cmpi eq, %37, %219 : vector<16x16xi32>
    %221 = vector.shape_cast %218 : vector<16x1xi32> to vector<16x1xi32>
    %222 = vector.broadcast %221 : vector<16x1xi32> to vector<16x16xi32>
    %223 = arith.select %220, %222, %202 : vector<16x16xi1>, vector<16x16xi32>
    %224 = vector.broadcast %214 : vector<16x1xi32> to vector<16x128xi32>
    %225 = arith.cmpi eq, %26, %224 : vector<16x128xi32>
    %cst_58 = arith.constant 0xFF800000 : f32
    %226 = vector.broadcast %cst_58 : f32 to vector<16x128xf32>
    %227 = arith.select %225, %226, %206 : vector<16x128xi1>, vector<16x128xf32>
    %c9_i32 = arith.constant 9 : i32
    %cst_59 = arith.constant dense<0xFF800000> : vector<16xf32>
    %228 = vector.multi_reduction <maximumf>, %227, %cst_59 [1] : vector<16x128xf32> to vector<16xf32>
    %229 = vector.shape_cast %228 : vector<16xf32> to vector<16x1xf32>
    %230 = vector.broadcast %229 : vector<16x1xf32> to vector<16x128xf32>
    %231 = arith.cmpf oeq, %227, %230 : vector<16x128xf32>
    %c128_i32_60 = arith.constant 128 : i32
    %232 = vector.broadcast %c128_i32_60 : i32 to vector<16x128xi32>
    %233 = arith.select %231, %26, %232 : vector<16x128xi1>, vector<16x128xi32>
    %cst_61 = arith.constant dense<2147483647> : vector<16xi32>
    %234 = vector.multi_reduction <minsi>, %233, %cst_61 [1] : vector<16x128xi32> to vector<16xi32>
    %235 = vector.shape_cast %234 : vector<16xi32> to vector<16x1xi32>
    %cst_62 = arith.constant 0xFF800000 : f32
    %236 = vector.broadcast %cst_62 : f32 to vector<16x1xf32>
    %237 = arith.cmpf ogt, %229, %236 : vector<16x1xf32>
    %c-1_i32_63 = arith.constant -1 : i32
    %238 = vector.broadcast %c-1_i32_63 : i32 to vector<16x1xi32>
    %239 = arith.select %237, %235, %238 : vector<16x1xi1>, vector<16x1xi32>
    %240 = vector.broadcast %c9_i32 : i32 to vector<16x16xi32>
    %241 = arith.cmpi eq, %37, %240 : vector<16x16xi32>
    %242 = vector.shape_cast %239 : vector<16x1xi32> to vector<16x1xi32>
    %243 = vector.broadcast %242 : vector<16x1xi32> to vector<16x16xi32>
    %244 = arith.select %241, %243, %223 : vector<16x16xi1>, vector<16x16xi32>
    %245 = vector.broadcast %235 : vector<16x1xi32> to vector<16x128xi32>
    %246 = arith.cmpi eq, %26, %245 : vector<16x128xi32>
    %cst_64 = arith.constant 0xFF800000 : f32
    %247 = vector.broadcast %cst_64 : f32 to vector<16x128xf32>
    %248 = arith.select %246, %247, %227 : vector<16x128xi1>, vector<16x128xf32>
    %c10_i32 = arith.constant 10 : i32
    %cst_65 = arith.constant dense<0xFF800000> : vector<16xf32>
    %249 = vector.multi_reduction <maximumf>, %248, %cst_65 [1] : vector<16x128xf32> to vector<16xf32>
    %250 = vector.shape_cast %249 : vector<16xf32> to vector<16x1xf32>
    %251 = vector.broadcast %250 : vector<16x1xf32> to vector<16x128xf32>
    %252 = arith.cmpf oeq, %248, %251 : vector<16x128xf32>
    %c128_i32_66 = arith.constant 128 : i32
    %253 = vector.broadcast %c128_i32_66 : i32 to vector<16x128xi32>
    %254 = arith.select %252, %26, %253 : vector<16x128xi1>, vector<16x128xi32>
    %cst_67 = arith.constant dense<2147483647> : vector<16xi32>
    %255 = vector.multi_reduction <minsi>, %254, %cst_67 [1] : vector<16x128xi32> to vector<16xi32>
    %256 = vector.shape_cast %255 : vector<16xi32> to vector<16x1xi32>
    %cst_68 = arith.constant 0xFF800000 : f32
    %257 = vector.broadcast %cst_68 : f32 to vector<16x1xf32>
    %258 = arith.cmpf ogt, %250, %257 : vector<16x1xf32>
    %c-1_i32_69 = arith.constant -1 : i32
    %259 = vector.broadcast %c-1_i32_69 : i32 to vector<16x1xi32>
    %260 = arith.select %258, %256, %259 : vector<16x1xi1>, vector<16x1xi32>
    %261 = vector.broadcast %c10_i32 : i32 to vector<16x16xi32>
    %262 = arith.cmpi eq, %37, %261 : vector<16x16xi32>
    %263 = vector.shape_cast %260 : vector<16x1xi32> to vector<16x1xi32>
    %264 = vector.broadcast %263 : vector<16x1xi32> to vector<16x16xi32>
    %265 = arith.select %262, %264, %244 : vector<16x16xi1>, vector<16x16xi32>
    %266 = vector.broadcast %256 : vector<16x1xi32> to vector<16x128xi32>
    %267 = arith.cmpi eq, %26, %266 : vector<16x128xi32>
    %cst_70 = arith.constant 0xFF800000 : f32
    %268 = vector.broadcast %cst_70 : f32 to vector<16x128xf32>
    %269 = arith.select %267, %268, %248 : vector<16x128xi1>, vector<16x128xf32>
    %c11_i32 = arith.constant 11 : i32
    %cst_71 = arith.constant dense<0xFF800000> : vector<16xf32>
    %270 = vector.multi_reduction <maximumf>, %269, %cst_71 [1] : vector<16x128xf32> to vector<16xf32>
    %271 = vector.shape_cast %270 : vector<16xf32> to vector<16x1xf32>
    %272 = vector.broadcast %271 : vector<16x1xf32> to vector<16x128xf32>
    %273 = arith.cmpf oeq, %269, %272 : vector<16x128xf32>
    %c128_i32_72 = arith.constant 128 : i32
    %274 = vector.broadcast %c128_i32_72 : i32 to vector<16x128xi32>
    %275 = arith.select %273, %26, %274 : vector<16x128xi1>, vector<16x128xi32>
    %cst_73 = arith.constant dense<2147483647> : vector<16xi32>
    %276 = vector.multi_reduction <minsi>, %275, %cst_73 [1] : vector<16x128xi32> to vector<16xi32>
    %277 = vector.shape_cast %276 : vector<16xi32> to vector<16x1xi32>
    %cst_74 = arith.constant 0xFF800000 : f32
    %278 = vector.broadcast %cst_74 : f32 to vector<16x1xf32>
    %279 = arith.cmpf ogt, %271, %278 : vector<16x1xf32>
    %c-1_i32_75 = arith.constant -1 : i32
    %280 = vector.broadcast %c-1_i32_75 : i32 to vector<16x1xi32>
    %281 = arith.select %279, %277, %280 : vector<16x1xi1>, vector<16x1xi32>
    %282 = vector.broadcast %c11_i32 : i32 to vector<16x16xi32>
    %283 = arith.cmpi eq, %37, %282 : vector<16x16xi32>
    %284 = vector.shape_cast %281 : vector<16x1xi32> to vector<16x1xi32>
    %285 = vector.broadcast %284 : vector<16x1xi32> to vector<16x16xi32>
    %286 = arith.select %283, %285, %265 : vector<16x16xi1>, vector<16x16xi32>
    %287 = vector.broadcast %277 : vector<16x1xi32> to vector<16x128xi32>
    %288 = arith.cmpi eq, %26, %287 : vector<16x128xi32>
    %cst_76 = arith.constant 0xFF800000 : f32
    %289 = vector.broadcast %cst_76 : f32 to vector<16x128xf32>
    %290 = arith.select %288, %289, %269 : vector<16x128xi1>, vector<16x128xf32>
    %c12_i32 = arith.constant 12 : i32
    %cst_77 = arith.constant dense<0xFF800000> : vector<16xf32>
    %291 = vector.multi_reduction <maximumf>, %290, %cst_77 [1] : vector<16x128xf32> to vector<16xf32>
    %292 = vector.shape_cast %291 : vector<16xf32> to vector<16x1xf32>
    %293 = vector.broadcast %292 : vector<16x1xf32> to vector<16x128xf32>
    %294 = arith.cmpf oeq, %290, %293 : vector<16x128xf32>
    %c128_i32_78 = arith.constant 128 : i32
    %295 = vector.broadcast %c128_i32_78 : i32 to vector<16x128xi32>
    %296 = arith.select %294, %26, %295 : vector<16x128xi1>, vector<16x128xi32>
    %cst_79 = arith.constant dense<2147483647> : vector<16xi32>
    %297 = vector.multi_reduction <minsi>, %296, %cst_79 [1] : vector<16x128xi32> to vector<16xi32>
    %298 = vector.shape_cast %297 : vector<16xi32> to vector<16x1xi32>
    %cst_80 = arith.constant 0xFF800000 : f32
    %299 = vector.broadcast %cst_80 : f32 to vector<16x1xf32>
    %300 = arith.cmpf ogt, %292, %299 : vector<16x1xf32>
    %c-1_i32_81 = arith.constant -1 : i32
    %301 = vector.broadcast %c-1_i32_81 : i32 to vector<16x1xi32>
    %302 = arith.select %300, %298, %301 : vector<16x1xi1>, vector<16x1xi32>
    %303 = vector.broadcast %c12_i32 : i32 to vector<16x16xi32>
    %304 = arith.cmpi eq, %37, %303 : vector<16x16xi32>
    %305 = vector.shape_cast %302 : vector<16x1xi32> to vector<16x1xi32>
    %306 = vector.broadcast %305 : vector<16x1xi32> to vector<16x16xi32>
    %307 = arith.select %304, %306, %286 : vector<16x16xi1>, vector<16x16xi32>
    %308 = vector.broadcast %298 : vector<16x1xi32> to vector<16x128xi32>
    %309 = arith.cmpi eq, %26, %308 : vector<16x128xi32>
    %cst_82 = arith.constant 0xFF800000 : f32
    %310 = vector.broadcast %cst_82 : f32 to vector<16x128xf32>
    %311 = arith.select %309, %310, %290 : vector<16x128xi1>, vector<16x128xf32>
    %c13_i32 = arith.constant 13 : i32
    %cst_83 = arith.constant dense<0xFF800000> : vector<16xf32>
    %312 = vector.multi_reduction <maximumf>, %311, %cst_83 [1] : vector<16x128xf32> to vector<16xf32>
    %313 = vector.shape_cast %312 : vector<16xf32> to vector<16x1xf32>
    %314 = vector.broadcast %313 : vector<16x1xf32> to vector<16x128xf32>
    %315 = arith.cmpf oeq, %311, %314 : vector<16x128xf32>
    %c128_i32_84 = arith.constant 128 : i32
    %316 = vector.broadcast %c128_i32_84 : i32 to vector<16x128xi32>
    %317 = arith.select %315, %26, %316 : vector<16x128xi1>, vector<16x128xi32>
    %cst_85 = arith.constant dense<2147483647> : vector<16xi32>
    %318 = vector.multi_reduction <minsi>, %317, %cst_85 [1] : vector<16x128xi32> to vector<16xi32>
    %319 = vector.shape_cast %318 : vector<16xi32> to vector<16x1xi32>
    %cst_86 = arith.constant 0xFF800000 : f32
    %320 = vector.broadcast %cst_86 : f32 to vector<16x1xf32>
    %321 = arith.cmpf ogt, %313, %320 : vector<16x1xf32>
    %c-1_i32_87 = arith.constant -1 : i32
    %322 = vector.broadcast %c-1_i32_87 : i32 to vector<16x1xi32>
    %323 = arith.select %321, %319, %322 : vector<16x1xi1>, vector<16x1xi32>
    %324 = vector.broadcast %c13_i32 : i32 to vector<16x16xi32>
    %325 = arith.cmpi eq, %37, %324 : vector<16x16xi32>
    %326 = vector.shape_cast %323 : vector<16x1xi32> to vector<16x1xi32>
    %327 = vector.broadcast %326 : vector<16x1xi32> to vector<16x16xi32>
    %328 = arith.select %325, %327, %307 : vector<16x16xi1>, vector<16x16xi32>
    %329 = vector.broadcast %319 : vector<16x1xi32> to vector<16x128xi32>
    %330 = arith.cmpi eq, %26, %329 : vector<16x128xi32>
    %cst_88 = arith.constant 0xFF800000 : f32
    %331 = vector.broadcast %cst_88 : f32 to vector<16x128xf32>
    %332 = arith.select %330, %331, %311 : vector<16x128xi1>, vector<16x128xf32>
    %c14_i32 = arith.constant 14 : i32
    %cst_89 = arith.constant dense<0xFF800000> : vector<16xf32>
    %333 = vector.multi_reduction <maximumf>, %332, %cst_89 [1] : vector<16x128xf32> to vector<16xf32>
    %334 = vector.shape_cast %333 : vector<16xf32> to vector<16x1xf32>
    %335 = vector.broadcast %334 : vector<16x1xf32> to vector<16x128xf32>
    %336 = arith.cmpf oeq, %332, %335 : vector<16x128xf32>
    %c128_i32_90 = arith.constant 128 : i32
    %337 = vector.broadcast %c128_i32_90 : i32 to vector<16x128xi32>
    %338 = arith.select %336, %26, %337 : vector<16x128xi1>, vector<16x128xi32>
    %cst_91 = arith.constant dense<2147483647> : vector<16xi32>
    %339 = vector.multi_reduction <minsi>, %338, %cst_91 [1] : vector<16x128xi32> to vector<16xi32>
    %340 = vector.shape_cast %339 : vector<16xi32> to vector<16x1xi32>
    %cst_92 = arith.constant 0xFF800000 : f32
    %341 = vector.broadcast %cst_92 : f32 to vector<16x1xf32>
    %342 = arith.cmpf ogt, %334, %341 : vector<16x1xf32>
    %c-1_i32_93 = arith.constant -1 : i32
    %343 = vector.broadcast %c-1_i32_93 : i32 to vector<16x1xi32>
    %344 = arith.select %342, %340, %343 : vector<16x1xi1>, vector<16x1xi32>
    %345 = vector.broadcast %c14_i32 : i32 to vector<16x16xi32>
    %346 = arith.cmpi eq, %37, %345 : vector<16x16xi32>
    %347 = vector.shape_cast %344 : vector<16x1xi32> to vector<16x1xi32>
    %348 = vector.broadcast %347 : vector<16x1xi32> to vector<16x16xi32>
    %349 = arith.select %346, %348, %328 : vector<16x16xi1>, vector<16x16xi32>
    %350 = vector.broadcast %340 : vector<16x1xi32> to vector<16x128xi32>
    %351 = arith.cmpi eq, %26, %350 : vector<16x128xi32>
    %cst_94 = arith.constant 0xFF800000 : f32
    %352 = vector.broadcast %cst_94 : f32 to vector<16x128xf32>
    %353 = arith.select %351, %352, %332 : vector<16x128xi1>, vector<16x128xf32>
    %c15_i32 = arith.constant 15 : i32
    %cst_95 = arith.constant dense<0xFF800000> : vector<16xf32>
    %354 = vector.multi_reduction <maximumf>, %353, %cst_95 [1] : vector<16x128xf32> to vector<16xf32>
    %355 = vector.shape_cast %354 : vector<16xf32> to vector<16x1xf32>
    %356 = vector.broadcast %355 : vector<16x1xf32> to vector<16x128xf32>
    %357 = arith.cmpf oeq, %353, %356 : vector<16x128xf32>
    %c128_i32_96 = arith.constant 128 : i32
    %358 = vector.broadcast %c128_i32_96 : i32 to vector<16x128xi32>
    %359 = arith.select %357, %26, %358 : vector<16x128xi1>, vector<16x128xi32>
    %cst_97 = arith.constant dense<2147483647> : vector<16xi32>
    %360 = vector.multi_reduction <minsi>, %359, %cst_97 [1] : vector<16x128xi32> to vector<16xi32>
    %361 = vector.shape_cast %360 : vector<16xi32> to vector<16x1xi32>
    %cst_98 = arith.constant 0xFF800000 : f32
    %362 = vector.broadcast %cst_98 : f32 to vector<16x1xf32>
    %363 = arith.cmpf ogt, %355, %362 : vector<16x1xf32>
    %c-1_i32_99 = arith.constant -1 : i32
    %364 = vector.broadcast %c-1_i32_99 : i32 to vector<16x1xi32>
    %365 = arith.select %363, %361, %364 : vector<16x1xi1>, vector<16x1xi32>
    %366 = vector.broadcast %c15_i32 : i32 to vector<16x16xi32>
    %367 = arith.cmpi eq, %37, %366 : vector<16x16xi32>
    %368 = vector.shape_cast %365 : vector<16x1xi32> to vector<16x1xi32>
    %369 = vector.broadcast %368 : vector<16x1xi32> to vector<16x16xi32>
    %370 = arith.select %367, %369, %349 : vector<16x16xi1>, vector<16x16xi32>
    %371 = vector.broadcast %361 : vector<16x1xi32> to vector<16x128xi32>
    %372 = arith.cmpi eq, %26, %371 : vector<16x128xi32>
    %cst_100 = arith.constant 0xFF800000 : f32
    %373 = vector.broadcast %cst_100 : f32 to vector<16x128xf32>
    %374 = arith.select %372, %373, %353 : vector<16x128xi1>, vector<16x128xf32>
    %c16_i32 = arith.constant 16 : i32
    %c0_101 = arith.constant 0 : index
    %c0_102 = arith.constant 0 : index
    %c0_103 = arith.constant 0 : index
    %375 = vector.load %arg4[%c0_101, %c0_102, %c0_103] : memref<1x16x16xi32, #tpu.memory_space<vmem>>, vector<1x16x16xi32>
    %376 = vector.shape_cast %375 : vector<1x16x16xi32> to vector<16x16xi32>
    %377 = vector.shape_cast %370 : vector<16x16xi32> to vector<1x16x16xi32>
    tpu.vector_store %arg4[%c0_101, %c0_102, %c0_103], %377 {strides = array<i32>} : memref<1x16x16xi32, #tpu.memory_space<vmem>>, vector<1x16x16xi32>,
    return
  }
  func.func @transform_0(%arg0: i32, %arg1: memref<2xi32, #tpu.memory_space<smem>>) -> (i32, i32, i32) {
    %c0_i32 = arith.constant 0 : i32
    %c0_i32_0 = arith.constant 0 : i32
    %c0_i32_1 = arith.constant 0 : i32
    return %arg0, %c0_i32, %c0_i32_0 : i32, i32, i32
  }
  func.func @transform_1(%arg0: i32, %arg1: memref<2xi32, #tpu.memory_space<smem>>) -> (i32, i32, i32) {
    %c0_i32 = arith.constant 0 : i32
    %c0_i32_0 = arith.constant 0 : i32
    %c0_i32_1 = arith.constant 0 : i32
    return %arg0, %c0_i32, %c0_i32_0 : i32, i32, i32
  }
  func.func @transform_2(%arg0: i32, %arg1: memref<2xi32, #tpu.memory_space<smem>>) -> (i32, i32, i32) {
    %c0_i32 = arith.constant 0 : i32
    %c0_i32_0 = arith.constant 0 : i32
    %c0_i32_1 = arith.constant 0 : i32
    return %arg0, %c0_i32, %c0_i32_0 : i32, i32, i32
  }
}

</mosaic_0001>

<llo_original>
// kernel: tpu_custom_call.1
$region0: #{tpu_custom_call.1}
  #allocation0 [shape = 'u32[]', space=smem, size = 0x4, offset = 0x4, fixed_abs, tag = 'smem constant byte address 0x4 - core index']
  #allocation1 [shape = 'u32[72,128]{1,0:T(1,128)}', space=vmem, size = 0x9000, scoped, tag = 'internal scratch']
  #allocation2 [shape = 's32[1]{0}', space=sflag, size = 0x4, scoped, tag = 'scoped memory for tpu_custom_call.1']
  #allocation3 [shape = 'u8[512]{0}', space=smem, size = 0x200, scoped, tag = 'prefetched SMEM operand 0']
  %s0 = inlined_call_operand.vmem [shape: s32[2], index: 0, kind: input, shape index: {}]
  %s1 = inlined_call_operand.vmem [shape: f32[2,4,128], index: 1, kind: input, shape index: {}]
  %s2 = inlined_call_operand.vmem [shape: f32[2,16,3], index: 2, kind: input, shape index: {}]
  %s3 = inlined_call_operand.hbm [shape: s32[2,16,16], index: 3, kind: output, shape index: {}]
  %s4 = sld [smem:[#allocation0]]
  $region41: #{tpu_custom_call.1} parent=0
    _
  %s6 = ssub.s32 1, %s4
  %s7 = scalar_select 0, %s6, %s4
  %s9 = sshll.u32 %s0, 4
  %s10 = int_to_ptr.vmem [resolvable:$true] %s9
  %12 = dma.vmem_to_smem %s10, 16, [#allocation3], [#allocation2]
  %14 = dma.done [#allocation2], 16
  %15 = sfence
  $region1: #{tpu_custom_call.1} parent=0
    #allocation4 [shape = 'u8[16384]{0}', space=vmem, size = 0x4000, scoped, tag = 'output window, operand 0']
    #allocation5 [shape = 's32[2]{0}', space=sflag, size = 0x8, scoped, tag = 'scoped memory for tpu_custom_call.1']
    %16 = vsyncpa [#allocation5], 0
    %s17 = scalar_lea.sflag [#allocation5], 1
    %18 = vsyncpa %s17, 0
    loop: start=0, step=1, limit=4
    $region2: #{tpu_custom_call.1} parent=1 // loop_pre_header
      _
    $region3: #{tpu_custom_call.1} parent=1 // loop_header
      %s20 = sphi 0, %s24
      %p21 = scmp.ge.s32.totalorder %s20, 4
      %s30 = sphi 0, %s32
      %s33 = sphi 0, %s30
      %s34 = sphi 0, %s33
      %s50 = sphi 0, %s34
      %s56 = sphi 0, %s58
      %s59 = sphi 0, %s56
      %s60 = sphi 0, %s59
      %s76 = sphi 0, %s60
      %s82 = sphi 0, %s84
      %s85 = sphi 0, %s82
      %s86 = sphi 0, %s85
      %s102 = sphi 0, %s86
    $region4: #{tpu_custom_call.1} parent=1 // loop_header_branch
      %23 = sbr.rel (%p21) target = $region8
    $region5: #{tpu_custom_call.1} parent=1 // loop_body
      %s25 = ssub.s32 %s20, 1
      %s26 = ssub.s32 %s20, 2
      %s27 = sadd.s32 %s20, 1
      %s28 = ssub.s32 %s20, %s27
      %p29 = scmp.eq.s32.totalorder %s28, 0
      %s31 = sadd.s32 %s30, 1
      %s32 = scalar_select %p29, %s30, %s31
      %p35 = pneg %p29
      %p36 = scmp.eq.s32.totalorder %s20, 1
      %p37 = por %p35, %p36
      %p38 = scmp.ne.s32.totalorder %s30, %s33
      %p39 = scmp.eq.s32.totalorder %s20, 0
      %p40 = por %p38, %p39
      %p41 = scmp.ne.s32.totalorder %s30, %s33
      %p42 = scmp.eq.s32.totalorder %s25, 1
      %p43 = por %p41, %p42
      %p44 = scmp.ne.s32.totalorder %s33, %s34
      %p45 = scmp.eq.s32.totalorder %s25, 0
      %p46 = por %p44, %p45
      %p47 = scmp.ne.s32.totalorder %s33, %s34
      %p48 = scmp.eq.s32.totalorder %s26, 1
      %p49 = por %p47, %p48
      %p51 = scmp.ne.s32.totalorder %s34, %s50
      %p52 = scmp.eq.s32.totalorder %s26, 0
      %p53 = por %p51, %p52
      %s54 = ssub.s32 %s20, %s27
      %p55 = scmp.eq.s32.totalorder %s54, 0
      %s57 = sadd.s32 %s56, 1
      %s58 = scalar_select %p55, %s56, %s57
      %p61 = pneg %p55
      %p62 = scmp.eq.s32.totalorder %s20, 1
      %p63 = por %p61, %p62
      %p64 = scmp.ne.s32.totalorder %s56, %s59
      %p65 = scmp.eq.s32.totalorder %s20, 0
      %p66 = por %p64, %p65
      %p67 = scmp.ne.s32.totalorder %s56, %s59
      %p68 = scmp.eq.s32.totalorder %s25, 1
      %p69 = por %p67, %p68
      %p70 = scmp.ne.s32.totalorder %s59, %s60
      %p71 = scmp.eq.s32.totalorder %s25, 0
      %p72 = por %p70, %p71
      %p73 = scmp.ne.s32.totalorder %s59, %s60
      %p74 = scmp.eq.s32.totalorder %s26, 1
      %p75 = por %p73, %p74
      %p77 = scmp.ne.s32.totalorder %s60, %s76
      %p78 = scmp.eq.s32.totalorder %s26, 0
      %p79 = por %p77, %p78
      %s80 = ssub.s32 %s20, %s27
      %p81 = scmp.eq.s32.totalorder %s80, 0
      %s83 = sadd.s32 %s82, 1
      %s84 = scalar_select %p81, %s82, %s83
      %p87 = pneg %p81
      %p88 = scmp.eq.s32.totalorder %s20, 1
      %p89 = por %p87, %p88
      %p90 = scmp.ne.s32.totalorder %s82, %s85
      %p91 = scmp.eq.s32.totalorder %s20, 0
      %p92 = por %p90, %p91
      %p93 = scmp.ne.s32.totalorder %s82, %s85
      %p94 = scmp.eq.s32.totalorder %s25, 1
      %p95 = por %p93, %p94
      %p96 = scmp.ne.s32.totalorder %s85, %s86
      %p97 = scmp.eq.s32.totalorder %s25, 0
      %p98 = por %p96, %p97
      %p99 = scmp.ne.s32.totalorder %s85, %s86
      %p100 = scmp.eq.s32.totalorder %s26, 1
      %p101 = por %p99, %p100
      %p103 = scmp.ne.s32.totalorder %s86, %s102
      %p104 = scmp.eq.s32.totalorder %s26, 0
      %p105 = por %p103, %p104
      %p106 = scmp.le.s32.totalorder 1, %s20
      %p107 = scmp.lt.s32.totalorder %s20, 3
      %p108 = pnand %p106, %p107
      %p109 = pneg %p108
      // Predicated region
      $region9: #{tpu_custom_call.1} parent=5 // pred_check
        _
      $region10: #{tpu_custom_call.1} parent=5 // pred_check_branch
        %111 = sbr.rel (%p108) target = $region12
      $region11: #{tpu_custom_call.1} parent=5 // pred_region
        %s112 = ssub.s32 %s20, 1
      $region12: #{tpu_custom_call.1} parent=5 // pred_fallthru
        _
      %p113 = scmp.lt.s32.totalorder %s20, 2
      // Predicated region
      $region13: #{tpu_custom_call.1} parent=5 // pred_check
        %p114 = pneg %p113
      $region14: #{tpu_custom_call.1} parent=5 // pred_check_branch
        %116 = sbr.rel (%p114) target = $region16
      $region15: #{tpu_custom_call.1} parent=5 // pred_region
        // Predicated region
        $region17: #{tpu_custom_call.1} parent=15 // pred_check
          %p117 = pneg %p40
        $region18: #{tpu_custom_call.1} parent=15 // pred_check_branch
          %119 = sbr.rel (%p117) target = $region20
        $region19: #{tpu_custom_call.1} parent=15 // pred_region
          %p120 = scmp.lt.s32.totalorder %s20, 1
          %s121 = scalar_select %p120, %s20, 1
          %s122 = smul.addr %s121, 4
          %s123 = scalar_lea.vmem %s1, %s122
        $region20: #{tpu_custom_call.1} parent=15 // pred_fallthru
          _
        // Predicated region
        $region21: #{tpu_custom_call.1} parent=15 // pred_check
          %p124 = pneg %p66
        $region22: #{tpu_custom_call.1} parent=15 // pred_check_branch
          %126 = sbr.rel (%p124) target = $region24
        $region23: #{tpu_custom_call.1} parent=15 // pred_region
          %p127 = scmp.lt.s32.totalorder %s20, 1
          %s128 = scalar_select %p127, %s20, 1
          %s129 = smul.addr %s128, 2
          %s130 = smul.addr %s129, 8
          %s131 = scalar_lea.vmem %s2, %s130
        $region24: #{tpu_custom_call.1} parent=15 // pred_fallthru
          _
      $region16: #{tpu_custom_call.1} parent=5 // pred_fallthru
        _
      %p132 = scmp.le.s32.totalorder 1, %s20
      %p133 = scmp.lt.s32.totalorder %s20, 3
      %p134 = pnand %p132, %p133
      %p135 = pneg %p134
      // Predicated region
      $region25: #{tpu_custom_call.1} parent=5 // pred_check
        _
      $region26: #{tpu_custom_call.1} parent=5 // pred_check_branch
        %137 = sbr.rel (%p134) target = $region28
      $region27: #{tpu_custom_call.1} parent=5 // pred_region
        %s138 = ssub.s32 %s20, 1
        %p139 = scmp.lt.s32.totalorder %s25, 1
        %s140 = scalar_select %p139, %s25, 1
        %s141 = smul.addr %s140, 4
        %s142 = scalar_lea.vmem %s1, %s141
        %p143 = pneg %p46
        %p144 = pneg %p43
        %p145 = scmp.lt.s32.totalorder %s25, 1
        %s146 = scalar_select %p145, %s25, 1
        %s147 = smul.addr %s146, 2
        %s148 = smul.addr %s147, 8
        %s149 = scalar_lea.vmem %s2, %s148
        %p150 = pneg %p72
        %p151 = pneg %p69
        %p152 = pneg %p98
        %p153 = pneg %p95
        %s154 = sand.u32 %s85, 1
        %s155 = scalar_lea.sflag [#allocation5], %s154
        %s156 = sand.u32 %s85, 1
        %s157 = smul.addr %s156, 16
        %s158 = scalar_lea.vmem [#allocation4], %s157
        %p159 = scmp.lt.s32.totalorder %s25, 1
        %s160 = scalar_select %p159, %s25, 1
        %s161 = smul.addr %s160, 4
        %s162 = scalar_lea.vmem %s1, %s161
        %p163 = scmp.lt.s32.totalorder %s25, 1
        %s164 = scalar_select %p163, %s25, 1
        %s165 = smul.addr %s164, 2
        %s166 = smul.addr %s165, 8
        %s167 = scalar_lea.vmem %s2, %s166
        %s168 = sld [smem:[#allocation3 + %s25]]
        %v169 = vld [vmem:[%s162] sm:$0xf]
        %v170 = vld [vmem:[%s167] sm:$0xff]
        %v171 = vld [vmem:[%s167 + $0x8] sm:$0xff]
        %173 = vset.pattern.permute.xlu0 0
        %174 = vperm.xlu0 %173, %v170
        %v175 = vpop.permute.xlu0 %174
        %178 = vset.pattern.permute.xlu0 0
        %179 = vperm.xlu0 %178, %v171
        %v180 = vpop.permute.xlu0 %179
        %v182 = vperm.slane %v169, 0
        %v183 = vsub.f32 %v175, %v182
        %v184 = vsub.f32 %v180, %v182
        %v185 = vmul.f32 %v183, %v183
        %v186 = vmul.f32 %v184, %v184
        %187 = vset.pattern.permute.xlu0 1
        %188 = vperm.xlu0 %187, %v170
        %v189 = vpop.permute.xlu0 %188
        %191 = vset.pattern.permute.xlu0 1
        %192 = vperm.xlu0 %191, %v171
        %v193 = vpop.permute.xlu0 %192
        %v195 = vperm.slane %v169, 1
        %v196 = vsub.f32 %v189, %v195
        %v197 = vsub.f32 %v193, %v195
        %v198 = vmul.f32 %v196, %v196
        %v199 = vmul.f32 %v197, %v197
        %v200 = vadd.f32 %v185, %v198
        %v201 = vadd.f32 %v186, %v199
        %202 = vset.pattern.permute.xlu0 2
        %203 = vperm.xlu0 %202, %v170
        %v204 = vpop.permute.xlu0 %203
        %206 = vset.pattern.permute.xlu0 2
        %207 = vperm.xlu0 %206, %v171
        %v208 = vpop.permute.xlu0 %207
        %v210 = vperm.slane %v169, 2
        %v211 = vsub.f32 %v204, %v210
        %v212 = vsub.f32 %v208, %v210
        %v213 = vmul.f32 %v211, %v211
        %v214 = vmul.f32 %v212, %v212
        %v215 = vadd.f32 %v200, %v213
        %v216 = vadd.f32 %v201, %v214
        %v217 = vlaneseq
        %v218 = vand.u32 %v217, 127
        %vm219 = vcmp.le.f32.partialorder %v215, 0.25
        %vm220 = vcmp.le.f32.partialorder %v216, 0.25
        %v221 = vstv %s168
        %vm222 = vcmp.lt.s32.totalorder %v218, %v221
        %vm223 = vmand %vm219, %vm222
        %vm224 = vmand %vm220, %vm222
        %v225 = vperm.slane %v169, 3
        %v226 = vsel %vm223, %v225, -inf
        %v227 = vsel %vm224, %v225, -inf
        %228 = vmax.xlane.f32.xlu0 %v226
        %v229 = vpop.xlane.xlu0 %228
        %230 = vmax.xlane.f32.xlu0 %v227
        %v231 = vpop.xlane.xlu0 %230
        %vm232 = vcmp.eq.f32.partialorder %v226, %v229
        %vm233 = vcmp.eq.f32.partialorder %v227, %v231
        %v234 = vsel %vm232, %v218, 128
        %v235 = vsel %vm233, %v218, 128
        %v236 = vand.u32 %v234, 65535
        %v237 = vshra.s32 %v234, 16
        %v238 = vcvt.s32.f32 %v236
        %v239 = vcvt.s32.f32 %v237
        %240 = vmin.xlane.f32.xlu0 %v239
        %v241 = vpop.xlane.xlu0 %240
        %vm242 = vcmp.eq.f32.partialorder %v239, %v241
        %v243 = vsel %vm242, %v238, inf
        %244 = vmin.xlane.f32.xlu0 %v243
        %v245 = vpop.xlane.xlu0 %244
        %v246 = vcvt.f32.s32 %v245
        %v247 = vcvt.f32.s32 %v241
        %v248 = vshll.u32 %v247, 16
        %v249 = vadd.s32 %v248, %v246
        %v250 = vand.u32 %v235, 65535
        %v251 = vshra.s32 %v235, 16
        %v252 = vcvt.s32.f32 %v250
        %v253 = vcvt.s32.f32 %v251
        %254 = vmin.xlane.f32.xlu0 %v253
        %v255 = vpop.xlane.xlu0 %254
        %vm256 = vcmp.eq.f32.partialorder %v253, %v255
        %v257 = vsel %vm256, %v252, inf
        %258 = vmin.xlane.f32.xlu0 %v257
        %v259 = vpop.xlane.xlu0 %258
        %v260 = vcvt.f32.s32 %v259
        %v261 = vcvt.f32.s32 %v255
        %v262 = vshll.u32 %v261, 16
        %v263 = vadd.s32 %v262, %v260
        %vm264 = vcmp.gt.f32.partialorder %v229, -inf
        %vm265 = vcmp.gt.f32.partialorder %v231, -inf
        %v266 = vsel %vm264, %v249, 4294967295
        %v267 = vsel %vm265, %v263, 4294967295
        %vm268 = vcmp.eq.s32.totalorder %v218, 0
        %v269 = vsel %vm268, %v266, 4294967295
        %v270 = vsel %vm268, %v267, 4294967295
        %vm271 = vcmp.eq.s32.totalorder %v218, %v249
        %vm272 = vcmp.eq.s32.totalorder %v218, %v263
        %v273 = vsel %vm271, -inf, %v226
        %v274 = vsel %vm272, -inf, %v227
        %275 = vmax.xlane.f32.xlu0 %v273
        %v276 = vpop.xlane.xlu0 %275
        %277 = vmax.xlane.f32.xlu0 %v274
        %v278 = vpop.xlane.xlu0 %277
        %vm279 = vcmp.eq.f32.partialorder %v273, %v276
        %vm280 = vcmp.eq.f32.partialorder %v274, %v278
        %v281 = vsel %vm279, %v218, 128
        %v282 = vsel %vm280, %v218, 128
        %v283 = vand.u32 %v281, 65535
        %v284 = vshra.s32 %v281, 16
        %v285 = vcvt.s32.f32 %v283
        %v286 = vcvt.s32.f32 %v284
        %287 = vmin.xlane.f32.xlu0 %v286
        %v288 = vpop.xlane.xlu0 %287
        %vm289 = vcmp.eq.f32.partialorder %v286, %v288
        %v290 = vsel %vm289, %v285, inf
        %291 = vmin.xlane.f32.xlu0 %v290
        %v292 = vpop.xlane.xlu0 %291
        %v293 = vcvt.f32.s32 %v292
        %v294 = vcvt.f32.s32 %v288
        %v295 = vshll.u32 %v294, 16
        %v296 = vadd.s32 %v295, %v293
        %v297 = vand.u32 %v282, 65535
        %v298 = vshra.s32 %v282, 16
        %v299 = vcvt.s32.f32 %v297
        %v300 = vcvt.s32.f32 %v298
        %301 = vmin.xlane.f32.xlu0 %v300
        %v302 = vpop.xlane.xlu0 %301
        %vm303 = vcmp.eq.f32.partialorder %v300, %v302
        %v304 = vsel %vm303, %v299, inf
        %305 = vmin.xlane.f32.xlu0 %v304
        %v306 = vpop.xlane.xlu0 %305
        %v307 = vcvt.f32.s32 %v306
        %v308 = vcvt.f32.s32 %v302
        %v309 = vshll.u32 %v308, 16
        %v310 = vadd.s32 %v309, %v307
        %vm311 = vcmp.gt.f32.partialorder %v276, -inf
        %vm312 = vcmp.gt.f32.partialorder %v278, -inf
        %v313 = vsel %vm311, %v296, 4294967295
        %v314 = vsel %vm312, %v310, 4294967295
        %vm315 = vcmp.eq.s32.totalorder %v218, 1
        %v316 = vsel %vm315, %v313, %v269
        %v317 = vsel %vm315, %v314, %v270
        %vm318 = vcmp.eq.s32.totalorder %v218, %v296
        %vm319 = vcmp.eq.s32.totalorder %v218, %v310
        %v320 = vsel %vm318, -inf, %v273
        %v321 = vsel %vm319, -inf, %v274
        %322 = vmax.xlane.f32.xlu0 %v320
        %v323 = vpop.xlane.xlu0 %322
        %324 = vmax.xlane.f32.xlu0 %v321
        %v325 = vpop.xlane.xlu0 %324
        %vm326 = vcmp.eq.f32.partialorder %v320, %v323
        %vm327 = vcmp.eq.f32.partialorder %v321, %v325
        %v328 = vsel %vm326, %v218, 128
        %v329 = vsel %vm327, %v218, 128
        %v330 = vand.u32 %v328, 65535
        %v331 = vshra.s32 %v328, 16
        %v332 = vcvt.s32.f32 %v330
        %v333 = vcvt.s32.f32 %v331
        %334 = vmin.xlane.f32.xlu0 %v333
        %v335 = vpop.xlane.xlu0 %334
        %vm336 = vcmp.eq.f32.partialorder %v333, %v335
        %v337 = vsel %vm336, %v332, inf
        %338 = vmin.xlane.f32.xlu0 %v337
        %v339 = vpop.xlane.xlu0 %338
        %v340 = vcvt.f32.s32 %v339
        %v341 = vcvt.f32.s32 %v335
        %v342 = vshll.u32 %v341, 16
        %v343 = vadd.s32 %v342, %v340
        %v344 = vand.u32 %v329, 65535
        %v345 = vshra.s32 %v329, 16
        %v346 = vcvt.s32.f32 %v344
        %v347 = vcvt.s32.f32 %v345
        %348 = vmin.xlane.f32.xlu0 %v347
        %v349 = vpop.xlane.xlu0 %348
        %vm350 = vcmp.eq.f32.partialorder %v347, %v349
        %v351 = vsel %vm350, %v346, inf
        %352 = vmin.xlane.f32.xlu0 %v351
        %v353 = vpop.xlane.xlu0 %352
        %v354 = vcvt.f32.s32 %v353
        %v355 = vcvt.f32.s32 %v349
        %v356 = vshll.u32 %v355, 16
        %v357 = vadd.s32 %v356, %v354
        %vm358 = vcmp.gt.f32.partialorder %v323, -inf
        %vm359 = vcmp.gt.f32.partialorder %v325, -inf
        %v360 = vsel %vm358, %v343, 4294967295
        %v361 = vsel %vm359, %v357, 4294967295
        %vm362 = vcmp.eq.s32.totalorder %v218, 2
        %v363 = vsel %vm362, %v360, %v316
        %v364 = vsel %vm362, %v361, %v317
        %vm365 = vcmp.eq.s32.totalorder %v218, %v343
        %vm366 = vcmp.eq.s32.totalorder %v218, %v357
        %v367 = vsel %vm365, -inf, %v320
        %v368 = vsel %vm366, -inf, %v321
        %369 = vmax.xlane.f32.xlu0 %v367
        %v370 = vpop.xlane.xlu0 %369
        %371 = vmax.xlane.f32.xlu0 %v368
        %v372 = vpop.xlane.xlu0 %371
        %vm373 = vcmp.eq.f32.partialorder %v367, %v370
        %vm374 = vcmp.eq.f32.partialorder %v368, %v372
        %v375 = vsel %vm373, %v218, 128
        %v376 = vsel %vm374, %v218, 128
        %v377 = vand.u32 %v375, 65535
        %v378 = vshra.s32 %v375, 16
        %v379 = vcvt.s32.f32 %v377
        %v380 = vcvt.s32.f32 %v378
        %381 = vmin.xlane.f32.xlu0 %v380
        %v382 = vpop.xlane.xlu0 %381
        %vm383 = vcmp.eq.f32.partialorder %v380, %v382
        %v384 = vsel %vm383, %v379, inf
        %385 = vmin.xlane.f32.xlu0 %v384
        %v386 = vpop.xlane.xlu0 %385
        %v387 = vcvt.f32.s32 %v386
        %v388 = vcvt.f32.s32 %v382
        %v389 = vshll.u32 %v388, 16
        %v390 = vadd.s32 %v389, %v387
        %v391 = vand.u32 %v376, 65535
        %v392 = vshra.s32 %v376, 16
        %v393 = vcvt.s32.f32 %v391
        %v394 = vcvt.s32.f32 %v392
        %395 = vmin.xlane.f32.xlu0 %v394
        %v396 = vpop.xlane.xlu0 %395
        %vm397 = vcmp.eq.f32.partialorder %v394, %v396
        %v398 = vsel %vm397, %v393, inf
        %399 = vmin.xlane.f32.xlu0 %v398
        %v400 = vpop.xlane.xlu0 %399
        %v401 = vcvt.f32.s32 %v400
        %v402 = vcvt.f32.s32 %v396
        %v403 = vshll.u32 %v402, 16
        %v404 = vadd.s32 %v403, %v401
        %vm405 = vcmp.gt.f32.partialorder %v370, -inf
        %vm406 = vcmp.gt.f32.partialorder %v372, -inf
        %v407 = vsel %vm405, %v390, 4294967295
        %v408 = vsel %vm406, %v404, 4294967295
        %vm409 = vcmp.eq.s32.totalorder %v218, 3
        %v410 = vsel %vm409, %v407, %v363
        %v411 = vsel %vm409, %v408, %v364
        %vm412 = vcmp.eq.s32.totalorder %v218, %v390
        %vm413 = vcmp.eq.s32.totalorder %v218, %v404
        %v414 = vsel %vm412, -inf, %v367
        %v415 = vsel %vm413, -inf, %v368
        %416 = vmax.xlane.f32.xlu0 %v414
        %v417 = vpop.xlane.xlu0 %416
        %418 = vmax.xlane.f32.xlu0 %v415
        %v419 = vpop.xlane.xlu0 %418
        %vm420 = vcmp.eq.f32.partialorder %v414, %v417
        %vm421 = vcmp.eq.f32.partialorder %v415, %v419
        %v422 = vsel %vm420, %v218, 128
        %v423 = vsel %vm421, %v218, 128
        %v424 = vand.u32 %v422, 65535
        %v425 = vshra.s32 %v422, 16
        %v426 = vcvt.s32.f32 %v424
        %v427 = vcvt.s32.f32 %v425
        %428 = vmin.xlane.f32.xlu0 %v427
        %v429 = vpop.xlane.xlu0 %428
        %vm430 = vcmp.eq.f32.partialorder %v427, %v429
        %v431 = vsel %vm430, %v426, inf
        %432 = vmin.xlane.f32.xlu0 %v431
        %v433 = vpop.xlane.xlu0 %432
        %v434 = vcvt.f32.s32 %v433
        %v435 = vcvt.f32.s32 %v429
        %v436 = vshll.u32 %v435, 16
        %v437 = vadd.s32 %v436, %v434
        %v438 = vand.u32 %v423, 65535
        %v439 = vshra.s32 %v423, 16
        %v440 = vcvt.s32.f32 %v438
        %v441 = vcvt.s32.f32 %v439
        %442 = vmin.xlane.f32.xlu0 %v441
        %v443 = vpop.xlane.xlu0 %442
        %vm444 = vcmp.eq.f32.partialorder %v441, %v443
        %v445 = vsel %vm444, %v440, inf
        %446 = vmin.xlane.f32.xlu0 %v445
        %v447 = vpop.xlane.xlu0 %446
        %v448 = vcvt.f32.s32 %v447
        %v449 = vcvt.f32.s32 %v443
        %v450 = vshll.u32 %v449, 16
        %v451 = vadd.s32 %v450, %v448
        %vm452 = vcmp.gt.f32.partialorder %v417, -inf
        %vm453 = vcmp.gt.f32.partialorder %v419, -inf
        %v454 = vsel %vm452, %v437, 4294967295
        %v455 = vsel %vm453, %v451, 4294967295
        %vm456 = vcmp.eq.s32.totalorder %v218, 4
        %v457 = vsel %vm456, %v454, %v410
        %v458 = vsel %vm456, %v455, %v411
        %vm459 = vcmp.eq.s32.totalorder %v218, %v437
        %vm460 = vcmp.eq.s32.totalorder %v218, %v451
        %v461 = vsel %vm459, -inf, %v414
        %v462 = vsel %vm460, -inf, %v415
        %463 = vmax.xlane.f32.xlu0 %v461
        %v464 = vpop.xlane.xlu0 %463
        %465 = vmax.xlane.f32.xlu0 %v462
        %v466 = vpop.xlane.xlu0 %465
        %vm467 = vcmp.eq.f32.partialorder %v461, %v464
        %vm468 = vcmp.eq.f32.partialorder %v462, %v466
        %v469 = vsel %vm467, %v218, 128
        %v470 = vsel %vm468, %v218, 128
        %v471 = vand.u32 %v469, 65535
        %v472 = vshra.s32 %v469, 16
        %v473 = vcvt.s32.f32 %v471
        %v474 = vcvt.s32.f32 %v472
        %475 = vmin.xlane.f32.xlu0 %v474
        %v476 = vpop.xlane.xlu0 %475
        %vm477 = vcmp.eq.f32.partialorder %v474, %v476
        %v478 = vsel %vm477, %v473, inf
        %479 = vmin.xlane.f32.xlu0 %v478
        %v480 = vpop.xlane.xlu0 %479
        %v481 = vcvt.f32.s32 %v480
        %v482 = vcvt.f32.s32 %v476
        %v483 = vshll.u32 %v482, 16
        %v484 = vadd.s32 %v483, %v481
        %v485 = vand.u32 %v470, 65535
        %v486 = vshra.s32 %v470, 16
        %v487 = vcvt.s32.f32 %v485
        %v488 = vcvt.s32.f32 %v486
        %489 = vmin.xlane.f32.xlu0 %v488
        %v490 = vpop.xlane.xlu0 %489
        %vm491 = vcmp.eq.f32.partialorder %v488, %v490
        %v492 = vsel %vm491, %v487, inf
        %493 = vmin.xlane.f32.xlu0 %v492
        %v494 = vpop.xlane.xlu0 %493
        %v495 = vcvt.f32.s32 %v494
        %v496 = vcvt.f32.s32 %v490
        %v497 = vshll.u32 %v496, 16
        %v498 = vadd.s32 %v497, %v495
        %vm499 = vcmp.gt.f32.partialorder %v464, -inf
        %vm500 = vcmp.gt.f32.partialorder %v466, -inf
        %v501 = vsel %vm499, %v484, 4294967295
        %v502 = vsel %vm500, %v498, 4294967295
        %vm503 = vcmp.eq.s32.totalorder %v218, 5
        %v504 = vsel %vm503, %v501, %v457
        %v505 = vsel %vm503, %v502, %v458
        %vm506 = vcmp.eq.s32.totalorder %v218, %v484
        %vm507 = vcmp.eq.s32.totalorder %v218, %v498
        %v508 = vsel %vm506, -inf, %v461
        %v509 = vsel %vm507, -inf, %v462
        %510 = vmax.xlane.f32.xlu0 %v508
        %v511 = vpop.xlane.xlu0 %510
        %512 = vmax.xlane.f32.xlu0 %v509
        %v513 = vpop.xlane.xlu0 %512
        %vm514 = vcmp.eq.f32.partialorder %v508, %v511
        %vm515 = vcmp.eq.f32.partialorder %v509, %v513
        %v516 = vsel %vm514, %v218, 128
        %v517 = vsel %vm515, %v218, 128
        %v518 = vand.u32 %v516, 65535
        %v519 = vshra.s32 %v516, 16
        %v520 = vcvt.s32.f32 %v518
        %v521 = vcvt.s32.f32 %v519
        %522 = vmin.xlane.f32.xlu0 %v521
        %v523 = vpop.xlane.xlu0 %522
        %vm524 = vcmp.eq.f32.partialorder %v521, %v523
        %v525 = vsel %vm524, %v520, inf
        %526 = vmin.xlane.f32.xlu0 %v525
        %v527 = vpop.xlane.xlu0 %526
        %v528 = vcvt.f32.s32 %v527
        %v529 = vcvt.f32.s32 %v523
        %v530 = vshll.u32 %v529, 16
        %v531 = vadd.s32 %v530, %v528
        %v532 = vand.u32 %v517, 65535
        %v533 = vshra.s32 %v517, 16
        %v534 = vcvt.s32.f32 %v532
        %v535 = vcvt.s32.f32 %v533
        %536 = vmin.xlane.f32.xlu0 %v535
        %v537 = vpop.xlane.xlu0 %536
        %vm538 = vcmp.eq.f32.partialorder %v535, %v537
        %v539 = vsel %vm538, %v534, inf
        %540 = vmin.xlane.f32.xlu0 %v539
        %v541 = vpop.xlane.xlu0 %540
        %v542 = vcvt.f32.s32 %v541
        %v543 = vcvt.f32.s32 %v537
        %v544 = vshll.u32 %v543, 16
        %v545 = vadd.s32 %v544, %v542
        %vm546 = vcmp.gt.f32.partialorder %v511, -inf
        %vm547 = vcmp.gt.f32.partialorder %v513, -inf
        %v548 = vsel %vm546, %v531, 4294967295
        %v549 = vsel %vm547, %v545, 4294967295
        %vm550 = vcmp.eq.s32.totalorder %v218, 6
        %v551 = vsel %vm550, %v548, %v504
        %v552 = vsel %vm550, %v549, %v505
        %vm553 = vcmp.eq.s32.totalorder %v218, %v531
        %vm554 = vcmp.eq.s32.totalorder %v218, %v545
        %v555 = vsel %vm553, -inf, %v508
        %v556 = vsel %vm554, -inf, %v509
        %557 = vmax.xlane.f32.xlu0 %v555
        %v558 = vpop.xlane.xlu0 %557
        %559 = vmax.xlane.f32.xlu0 %v556
        %v560 = vpop.xlane.xlu0 %559
        %vm561 = vcmp.eq.f32.partialorder %v555, %v558
        %vm562 = vcmp.eq.f32.partialorder %v556, %v560
        %v563 = vsel %vm561, %v218, 128
        %v564 = vsel %vm562, %v218, 128
        %v565 = vand.u32 %v563, 65535
        %v566 = vshra.s32 %v563, 16
        %v567 = vcvt.s32.f32 %v565
        %v568 = vcvt.s32.f32 %v566
        %569 = vmin.xlane.f32.xlu0 %v568
        %v570 = vpop.xlane.xlu0 %569
        %vm571 = vcmp.eq.f32.partialorder %v568, %v570
        %v572 = vsel %vm571, %v567, inf
        %573 = vmin.xlane.f32.xlu0 %v572
        %v574 = vpop.xlane.xlu0 %573
        %v575 = vcvt.f32.s32 %v574
        %v576 = vcvt.f32.s32 %v570
        %v577 = vshll.u32 %v576, 16
        %v578 = vadd.s32 %v577, %v575
        %v579 = vand.u32 %v564, 65535
        %v580 = vshra.s32 %v564, 16
        %v581 = vcvt.s32.f32 %v579
        %v582 = vcvt.s32.f32 %v580
        %583 = vmin.xlane.f32.xlu0 %v582
        %v584 = vpop.xlane.xlu0 %583
        %vm585 = vcmp.eq.f32.partialorder %v582, %v584
        %v586 = vsel %vm585, %v581, inf
        %587 = vmin.xlane.f32.xlu0 %v586
        %v588 = vpop.xlane.xlu0 %587
        %v589 = vcvt.f32.s32 %v588
        %v590 = vcvt.f32.s32 %v584
        %v591 = vshll.u32 %v590, 16
        %v592 = vadd.s32 %v591, %v589
        %vm593 = vcmp.gt.f32.partialorder %v558, -inf
        %vm594 = vcmp.gt.f32.partialorder %v560, -inf
        %v595 = vsel %vm593, %v578, 4294967295
        %v596 = vsel %vm594, %v592, 4294967295
        %vm597 = vcmp.eq.s32.totalorder %v218, 7
        %v598 = vsel %vm597, %v595, %v551
        %v599 = vsel %vm597, %v596, %v552
        %vm600 = vcmp.eq.s32.totalorder %v218, %v578
        %vm601 = vcmp.eq.s32.totalorder %v218, %v592
        %v602 = vsel %vm600, -inf, %v555
        %v603 = vsel %vm601, -inf, %v556
        %604 = vmax.xlane.f32.xlu0 %v602
        %v605 = vpop.xlane.xlu0 %604
        %606 = vmax.xlane.f32.xlu0 %v603
        %v607 = vpop.xlane.xlu0 %606
        %vm608 = vcmp.eq.f32.partialorder %v602, %v605
        %vm609 = vcmp.eq.f32.partialorder %v603, %v607
        %v610 = vsel %vm608, %v218, 128
        %v611 = vsel %vm609, %v218, 128
        %v612 = vand.u32 %v610, 65535
        %v613 = vshra.s32 %v610, 16
        %v614 = vcvt.s32.f32 %v612
        %v615 = vcvt.s32.f32 %v613
        %616 = vmin.xlane.f32.xlu0 %v615
        %v617 = vpop.xlane.xlu0 %616
        %vm618 = vcmp.eq.f32.partialorder %v615, %v617
        %v619 = vsel %vm618, %v614, inf
        %620 = vmin.xlane.f32.xlu0 %v619
        %v621 = vpop.xlane.xlu0 %620
        %v622 = vcvt.f32.s32 %v621
        %v623 = vcvt.f32.s32 %v617
        %v624 = vshll.u32 %v623, 16
        %v625 = vadd.s32 %v624, %v622
        %v626 = vand.u32 %v611, 65535
        %v627 = vshra.s32 %v611, 16
        %v628 = vcvt.s32.f32 %v626
        %v629 = vcvt.s32.f32 %v627
        %630 = vmin.xlane.f32.xlu0 %v629
        %v631 = vpop.xlane.xlu0 %630
        %vm632 = vcmp.eq.f32.partialorder %v629, %v631
        %v633 = vsel %vm632, %v628, inf
        %634 = vmin.xlane.f32.xlu0 %v633
        %v635 = vpop.xlane.xlu0 %634
        %v636 = vcvt.f32.s32 %v635
        %v637 = vcvt.f32.s32 %v631
        %v638 = vshll.u32 %v637, 16
        %v639 = vadd.s32 %v638, %v636
        %vm640 = vcmp.gt.f32.partialorder %v605, -inf
        %vm641 = vcmp.gt.f32.partialorder %v607, -inf
        %v642 = vsel %vm640, %v625, 4294967295
        %v643 = vsel %vm641, %v639, 4294967295
        %vm644 = vcmp.eq.s32.totalorder %v218, 8
        %v645 = vsel %vm644, %v642, %v598
        %v646 = vsel %vm644, %v643, %v599
        %vm647 = vcmp.eq.s32.totalorder %v218, %v625
        %vm648 = vcmp.eq.s32.totalorder %v218, %v639
        %v649 = vsel %vm647, -inf, %v602
        %v650 = vsel %vm648, -inf, %v603
        %651 = vmax.xlane.f32.xlu0 %v649
        %v652 = vpop.xlane.xlu0 %651
        %653 = vmax.xlane.f32.xlu0 %v650
        %v654 = vpop.xlane.xlu0 %653
        %vm655 = vcmp.eq.f32.partialorder %v649, %v652
        %vm656 = vcmp.eq.f32.partialorder %v650, %v654
        %v657 = vsel %vm655, %v218, 128
        %v658 = vsel %vm656, %v218, 128
        %v659 = vand.u32 %v657, 65535
        %v660 = vshra.s32 %v657, 16
        %v661 = vcvt.s32.f32 %v659
        %v662 = vcvt.s32.f32 %v660
        %663 = vmin.xlane.f32.xlu0 %v662
        %v664 = vpop.xlane.xlu0 %663
        %vm665 = vcmp.eq.f32.partialorder %v662, %v664
        %v666 = vsel %vm665, %v661, inf
        %667 = vmin.xlane.f32.xlu0 %v666
        %v668 = vpop.xlane.xlu0 %667
        %v669 = vcvt.f32.s32 %v668
        %v670 = vcvt.f32.s32 %v664
        %v671 = vshll.u32 %v670, 16
        %v672 = vadd.s32 %v671, %v669
        %v673 = vand.u32 %v658, 65535
        %v674 = vshra.s32 %v658, 16
        %v675 = vcvt.s32.f32 %v673
        %v676 = vcvt.s32.f32 %v674
        %677 = vmin.xlane.f32.xlu0 %v676
        %v678 = vpop.xlane.xlu0 %677
        %vm679 = vcmp.eq.f32.partialorder %v676, %v678
        %v680 = vsel %vm679, %v675, inf
        %681 = vmin.xlane.f32.xlu0 %v680
        %v682 = vpop.xlane.xlu0 %681
        %v683 = vcvt.f32.s32 %v682
        %v684 = vcvt.f32.s32 %v678
        %v685 = vshll.u32 %v684, 16
        %v686 = vadd.s32 %v685, %v683
        %vm687 = vcmp.gt.f32.partialorder %v652, -inf
        %vm688 = vcmp.gt.f32.partialorder %v654, -inf
        %v689 = vsel %vm687, %v672, 4294967295
        %v690 = vsel %vm688, %v686, 4294967295
        %vm691 = vcmp.eq.s32.totalorder %v218, 9
        %v692 = vsel %vm691, %v689, %v645
        %v693 = vsel %vm691, %v690, %v646
        %vm694 = vcmp.eq.s32.totalorder %v218, %v672
        %vm695 = vcmp.eq.s32.totalorder %v218, %v686
        %v696 = vsel %vm694, -inf, %v649
        %v697 = vsel %vm695, -inf, %v650
        %698 = vmax.xlane.f32.xlu0 %v696
        %v699 = vpop.xlane.xlu0 %698
        %700 = vmax.xlane.f32.xlu0 %v697
        %v701 = vpop.xlane.xlu0 %700
        %vm702 = vcmp.eq.f32.partialorder %v696, %v699
        %vm703 = vcmp.eq.f32.partialorder %v697, %v701
        %v704 = vsel %vm702, %v218, 128
        %v705 = vsel %vm703, %v218, 128
        %v706 = vand.u32 %v704, 65535
        %v707 = vshra.s32 %v704, 16
        %v708 = vcvt.s32.f32 %v706
        %v709 = vcvt.s32.f32 %v707
        %710 = vmin.xlane.f32.xlu0 %v709
        %v711 = vpop.xlane.xlu0 %710
        %vm712 = vcmp.eq.f32.partialorder %v709, %v711
        %v713 = vsel %vm712, %v708, inf
        %714 = vmin.xlane.f32.xlu0 %v713
        %v715 = vpop.xlane.xlu0 %714
        %v716 = vcvt.f32.s32 %v715
        %v717 = vcvt.f32.s32 %v711
        %v718 = vshll.u32 %v717, 16
        %v719 = vadd.s32 %v718, %v716
        %v720 = vand.u32 %v705, 65535
        %v721 = vshra.s32 %v705, 16
        %v722 = vcvt.s32.f32 %v720
        %v723 = vcvt.s32.f32 %v721
        %724 = vmin.xlane.f32.xlu0 %v723
        %v725 = vpop.xlane.xlu0 %724
        %vm726 = vcmp.eq.f32.partialorder %v723, %v725
        %v727 = vsel %vm726, %v722, inf
        %728 = vmin.xlane.f32.xlu0 %v727
        %v729 = vpop.xlane.xlu0 %728
        %v730 = vcvt.f32.s32 %v729
        %v731 = vcvt.f32.s32 %v725
        %v732 = vshll.u32 %v731, 16
        %v733 = vadd.s32 %v732, %v730
        %vm734 = vcmp.gt.f32.partialorder %v699, -inf
        %vm735 = vcmp.gt.f32.partialorder %v701, -inf
        %v736 = vsel %vm734, %v719, 4294967295
        %v737 = vsel %vm735, %v733, 4294967295
        %vm738 = vcmp.eq.s32.totalorder %v218, 10
        %v739 = vsel %vm738, %v736, %v692
        %v740 = vsel %vm738, %v737, %v693
        %vm741 = vcmp.eq.s32.totalorder %v218, %v719
        %vm742 = vcmp.eq.s32.totalorder %v218, %v733
        %v743 = vsel %vm741, -inf, %v696
        %v744 = vsel %vm742, -inf, %v697
        %745 = vmax.xlane.f32.xlu0 %v743
        %v746 = vpop.xlane.xlu0 %745
        %747 = vmax.xlane.f32.xlu0 %v744
        %v748 = vpop.xlane.xlu0 %747
        %vm749 = vcmp.eq.f32.partialorder %v743, %v746
        %vm750 = vcmp.eq.f32.partialorder %v744, %v748
        %v751 = vsel %vm749, %v218, 128
        %v752 = vsel %vm750, %v218, 128
        %v753 = vand.u32 %v751, 65535
        %v754 = vshra.s32 %v751, 16
        %v755 = vcvt.s32.f32 %v753
        %v756 = vcvt.s32.f32 %v754
        %757 = vmin.xlane.f32.xlu0 %v756
        %v758 = vpop.xlane.xlu0 %757
        %vm759 = vcmp.eq.f32.partialorder %v756, %v758
        %v760 = vsel %vm759, %v755, inf
        %761 = vmin.xlane.f32.xlu0 %v760
        %v762 = vpop.xlane.xlu0 %761
        %v763 = vcvt.f32.s32 %v762
        %v764 = vcvt.f32.s32 %v758
        %v765 = vshll.u32 %v764, 16
        %v766 = vadd.s32 %v765, %v763
        %v767 = vand.u32 %v752, 65535
        %v768 = vshra.s32 %v752, 16
        %v769 = vcvt.s32.f32 %v767
        %v770 = vcvt.s32.f32 %v768
        %771 = vmin.xlane.f32.xlu0 %v770
        %v772 = vpop.xlane.xlu0 %771
        %vm773 = vcmp.eq.f32.partialorder %v770, %v772
        %v774 = vsel %vm773, %v769, inf
        %775 = vmin.xlane.f32.xlu0 %v774
        %v776 = vpop.xlane.xlu0 %775
        %v777 = vcvt.f32.s32 %v776
        %v778 = vcvt.f32.s32 %v772
        %v779 = vshll.u32 %v778, 16
        %v780 = vadd.s32 %v779, %v777
        %vm781 = vcmp.gt.f32.partialorder %v746, -inf
        %vm782 = vcmp.gt.f32.partialorder %v748, -inf
        %v783 = vsel %vm781, %v766, 4294967295
        %v784 = vsel %vm782, %v780, 4294967295
        %vm785 = vcmp.eq.s32.totalorder %v218, 11
        %v786 = vsel %vm785, %v783, %v739
        %v787 = vsel %vm785, %v784, %v740
        %vm788 = vcmp.eq.s32.totalorder %v218, %v766
        %vm789 = vcmp.eq.s32.totalorder %v218, %v780
        %v790 = vsel %vm788, -inf, %v743
        %v791 = vsel %vm789, -inf, %v744
        %792 = vmax.xlane.f32.xlu0 %v790
        %v793 = vpop.xlane.xlu0 %792
        %794 = vmax.xlane.f32.xlu0 %v791
        %v795 = vpop.xlane.xlu0 %794
        %vm796 = vcmp.eq.f32.partialorder %v790, %v793
        %vm797 = vcmp.eq.f32.partialorder %v791, %v795
        %v798 = vsel %vm796, %v218, 128
        %v799 = vsel %vm797, %v218, 128
        %v800 = vand.u32 %v798, 65535
        %v801 = vshra.s32 %v798, 16
        %v802 = vcvt.s32.f32 %v800
        %v803 = vcvt.s32.f32 %v801
        %804 = vmin.xlane.f32.xlu0 %v803
        %v805 = vpop.xlane.xlu0 %804
        %vm806 = vcmp.eq.f32.partialorder %v803, %v805
        %v807 = vsel %vm806, %v802, inf
        %808 = vmin.xlane.f32.xlu0 %v807
        %v809 = vpop.xlane.xlu0 %808
        %v810 = vcvt.f32.s32 %v809
        %v811 = vcvt.f32.s32 %v805
        %v812 = vshll.u32 %v811, 16
        %v813 = vadd.s32 %v812, %v810
        %v814 = vand.u32 %v799, 65535
        %v815 = vshra.s32 %v799, 16
        %v816 = vcvt.s32.f32 %v814
        %v817 = vcvt.s32.f32 %v815
        %818 = vmin.xlane.f32.xlu0 %v817
        %v819 = vpop.xlane.xlu0 %818
        %vm820 = vcmp.eq.f32.partialorder %v817, %v819
        %v821 = vsel %vm820, %v816, inf
        %822 = vmin.xlane.f32.xlu0 %v821
        %v823 = vpop.xlane.xlu0 %822
        %v824 = vcvt.f32.s32 %v823
        %v825 = vcvt.f32.s32 %v819
        %v826 = vshll.u32 %v825, 16
        %v827 = vadd.s32 %v826, %v824
        %vm828 = vcmp.gt.f32.partialorder %v793, -inf
        %vm829 = vcmp.gt.f32.partialorder %v795, -inf
        %v830 = vsel %vm828, %v813, 4294967295
        %v831 = vsel %vm829, %v827, 4294967295
        %vm832 = vcmp.eq.s32.totalorder %v218, 12
        %v833 = vsel %vm832, %v830, %v786
        %v834 = vsel %vm832, %v831, %v787
        %vm835 = vcmp.eq.s32.totalorder %v218, %v813
        %vm836 = vcmp.eq.s32.totalorder %v218, %v827
        %v837 = vsel %vm835, -inf, %v790
        %v838 = vsel %vm836, -inf, %v791
        %839 = vmax.xlane.f32.xlu0 %v837
        %v840 = vpop.xlane.xlu0 %839
        %841 = vmax.xlane.f32.xlu0 %v838
        %v842 = vpop.xlane.xlu0 %841
        %vm843 = vcmp.eq.f32.partialorder %v837, %v840
        %vm844 = vcmp.eq.f32.partialorder %v838, %v842
        %v845 = vsel %vm843, %v218, 128
        %v846 = vsel %vm844, %v218, 128
        %v847 = vand.u32 %v845, 65535
        %v848 = vshra.s32 %v845, 16
        %v849 = vcvt.s32.f32 %v847
        %v850 = vcvt.s32.f32 %v848
        %851 = vmin.xlane.f32.xlu0 %v850
        %v852 = vpop.xlane.xlu0 %851
        %vm853 = vcmp.eq.f32.partialorder %v850, %v852
        %v854 = vsel %vm853, %v849, inf
        %855 = vmin.xlane.f32.xlu0 %v854
        %v856 = vpop.xlane.xlu0 %855
        %v857 = vcvt.f32.s32 %v856
        %v858 = vcvt.f32.s32 %v852
        %v859 = vshll.u32 %v858, 16
        %v860 = vadd.s32 %v859, %v857
        %v861 = vand.u32 %v846, 65535
        %v862 = vshra.s32 %v846, 16
        %v863 = vcvt.s32.f32 %v861
        %v864 = vcvt.s32.f32 %v862
        %865 = vmin.xlane.f32.xlu0 %v864
        %v866 = vpop.xlane.xlu0 %865
        %vm867 = vcmp.eq.f32.partialorder %v864, %v866
        %v868 = vsel %vm867, %v863, inf
        %869 = vmin.xlane.f32.xlu0 %v868
        %v870 = vpop.xlane.xlu0 %869
        %v871 = vcvt.f32.s32 %v870
        %v872 = vcvt.f32.s32 %v866
        %v873 = vshll.u32 %v872, 16
        %v874 = vadd.s32 %v873, %v871
        %vm875 = vcmp.gt.f32.partialorder %v840, -inf
        %vm876 = vcmp.gt.f32.partialorder %v842, -inf
        %v877 = vsel %vm875, %v860, 4294967295
        %v878 = vsel %vm876, %v874, 4294967295
        %vm879 = vcmp.eq.s32.totalorder %v218, 13
        %v880 = vsel %vm879, %v877, %v833
        %v881 = vsel %vm879, %v878, %v834
        %vm882 = vcmp.eq.s32.totalorder %v218, %v860
        %vm883 = vcmp.eq.s32.totalorder %v218, %v874
        %v884 = vsel %vm882, -inf, %v837
        %v885 = vsel %vm883, -inf, %v838
        %886 = vmax.xlane.f32.xlu0 %v884
        %v887 = vpop.xlane.xlu0 %886
        %888 = vmax.xlane.f32.xlu0 %v885
        %v889 = vpop.xlane.xlu0 %888
        %vm890 = vcmp.eq.f32.partialorder %v884, %v887
        %vm891 = vcmp.eq.f32.partialorder %v885, %v889
        %v892 = vsel %vm890, %v218, 128
        %v893 = vsel %vm891, %v218, 128
        %v894 = vand.u32 %v892, 65535
        %v895 = vshra.s32 %v892, 16
        %v896 = vcvt.s32.f32 %v894
        %v897 = vcvt.s32.f32 %v895
        %898 = vmin.xlane.f32.xlu0 %v897
        %v899 = vpop.xlane.xlu0 %898
        %vm900 = vcmp.eq.f32.partialorder %v897, %v899
        %v901 = vsel %vm900, %v896, inf
        %902 = vmin.xlane.f32.xlu0 %v901
        %v903 = vpop.xlane.xlu0 %902
        %v904 = vcvt.f32.s32 %v903
        %v905 = vcvt.f32.s32 %v899
        %v906 = vshll.u32 %v905, 16
        %v907 = vadd.s32 %v906, %v904
        %v908 = vand.u32 %v893, 65535
        %v909 = vshra.s32 %v893, 16
        %v910 = vcvt.s32.f32 %v908
        %v911 = vcvt.s32.f32 %v909
        %912 = vmin.xlane.f32.xlu0 %v911
        %v913 = vpop.xlane.xlu0 %912
        %vm914 = vcmp.eq.f32.partialorder %v911, %v913
        %v915 = vsel %vm914, %v910, inf
        %916 = vmin.xlane.f32.xlu0 %v915
        %v917 = vpop.xlane.xlu0 %916
        %v918 = vcvt.f32.s32 %v917
        %v919 = vcvt.f32.s32 %v913
        %v920 = vshll.u32 %v919, 16
        %v921 = vadd.s32 %v920, %v918
        %vm922 = vcmp.gt.f32.partialorder %v887, -inf
        %vm923 = vcmp.gt.f32.partialorder %v889, -inf
        %v924 = vsel %vm922, %v907, 4294967295
        %v925 = vsel %vm923, %v921, 4294967295
        %vm926 = vcmp.eq.s32.totalorder %v218, 14
        %v927 = vsel %vm926, %v924, %v880
        %v928 = vsel %vm926, %v925, %v881
        %vm929 = vcmp.eq.s32.totalorder %v218, %v907
        %vm930 = vcmp.eq.s32.totalorder %v218, %v921
        %v931 = vsel %vm929, -inf, %v884
        %v932 = vsel %vm930, -inf, %v885
        %933 = vmax.xlane.f32.xlu0 %v931
        %v934 = vpop.xlane.xlu0 %933
        %935 = vmax.xlane.f32.xlu0 %v932
        %v936 = vpop.xlane.xlu0 %935
        %vm937 = vcmp.eq.f32.partialorder %v931, %v934
        %vm938 = vcmp.eq.f32.partialorder %v932, %v936
        %v939 = vsel %vm937, %v218, 128
        %v940 = vsel %vm938, %v218, 128
        %v941 = vand.u32 %v939, 65535
        %v942 = vshra.s32 %v939, 16
        %v943 = vcvt.s32.f32 %v941
        %v944 = vcvt.s32.f32 %v942
        %945 = vmin.xlane.f32.xlu0 %v944
        %v946 = vpop.xlane.xlu0 %945
        %vm947 = vcmp.eq.f32.partialorder %v944, %v946
        %v948 = vsel %vm947, %v943, inf
        %949 = vmin.xlane.f32.xlu0 %v948
        %v950 = vpop.xlane.xlu0 %949
        %v951 = vcvt.f32.s32 %v950
        %v952 = vcvt.f32.s32 %v946
        %v953 = vshll.u32 %v952, 16
        %v954 = vadd.s32 %v953, %v951
        %v955 = vand.u32 %v940, 65535
        %v956 = vshra.s32 %v940, 16
        %v957 = vcvt.s32.f32 %v955
        %v958 = vcvt.s32.f32 %v956
        %959 = vmin.xlane.f32.xlu0 %v958
        %v960 = vpop.xlane.xlu0 %959
        %vm961 = vcmp.eq.f32.partialorder %v958, %v960
        %v962 = vsel %vm961, %v957, inf
        %963 = vmin.xlane.f32.xlu0 %v962
        %v964 = vpop.xlane.xlu0 %963
        %v965 = vcvt.f32.s32 %v964
        %v966 = vcvt.f32.s32 %v960
        %v967 = vshll.u32 %v966, 16
        %v968 = vadd.s32 %v967, %v965
        %vm969 = vcmp.gt.f32.partialorder %v934, -inf
        %vm970 = vcmp.gt.f32.partialorder %v936, -inf
        %v971 = vsel %vm969, %v954, 4294967295
        %v972 = vsel %vm970, %v968, 4294967295
        %vm973 = vcmp.eq.s32.totalorder %v218, 15
        %v974 = vsel %vm973, %v971, %v927
        %v975 = vsel %vm973, %v972, %v928
        %vm976 = vcmask 130048
        %977 = vst.msk [vmem:[%s158] sm:$0xff] %vm976, %v974
        %978 = vst.msk [vmem:[%s158 + $0x8] sm:$0xff] %vm976, %v975
        %s979 = sand.u32 %s85, 1
        %s980 = scalar_lea.sflag [#allocation5], %s979
        %s981 = sand.u32 %s85, 1
        %s982 = smul.addr %s981, 16
        %s983 = scalar_lea.vmem [#allocation4], %s982
        // Predicated region
        $region29: #{tpu_custom_call.1} parent=27 // pred_check
          %p984 = pneg %p95
        $region30: #{tpu_custom_call.1} parent=27 // pred_check_branch
          %986 = sbr.rel (%p984) target = $region32
        $region31: #{tpu_custom_call.1} parent=27 // pred_region
          %988 = vsyncadd %s980, 0
          %s989 = smul.addr %s25, 2
          %s990 = smul.addr %s989, 8
          %s991 = scalar_lea.hbm %s3, %s990
          %s992 = sshll.u32 %s983, 4
          %s993 = int_to_ptr.vmem [resolvable:$true] %s992
          %s994 = sshll.u32 %s991, 4
          %s995 = int_to_ptr.hbm [resolvable:$true] %s994
          %1000 = dma.vmem_to_hbm [thread:$0]  %s993, 256, %s995, %s980, 128, 128, 8
        $region32: #{tpu_custom_call.1} parent=27 // pred_fallthru
          _
      $region28: #{tpu_custom_call.1} parent=5 // pred_fallthru
        _
      %p1001 = scmp.le.s32.totalorder 2, %s20
      // Predicated region
      $region33: #{tpu_custom_call.1} parent=5 // pred_check
        %p1002 = pneg %p1001
      $region34: #{tpu_custom_call.1} parent=5 // pred_check_branch
        %1004 = sbr.rel (%p1002) target = $region36
      $region35: #{tpu_custom_call.1} parent=5 // pred_region
        %s1005 = ssub.s32 %s20, 2
        // Predicated region
        $region37: #{tpu_custom_call.1} parent=35 // pred_check
          %p1006 = pneg %p101
        $region38: #{tpu_custom_call.1} parent=35 // pred_check_branch
          %1008 = sbr.rel (%p1006) target = $region40
        $region39: #{tpu_custom_call.1} parent=35 // pred_region
          %s1009 = sand.u32 %s86, 1
          %s1010 = scalar_lea.sflag [#allocation5], %s1009
          %s1011 = sand.u32 %s86, 1
          %s1012 = smul.addr %s1011, 16
          %s1013 = scalar_lea.vmem [#allocation4], %s1012
          %1015 = dma.done %s1010, 256
        $region40: #{tpu_custom_call.1} parent=35 // pred_fallthru
          _
      $region36: #{tpu_custom_call.1} parent=5 // pred_fallthru
        _
    $region6: #{tpu_custom_call.1} parent=1 // loop_footer
      %s24 = sadd.s32 1, %s20
    $region7: #{tpu_custom_call.1} parent=1 // loop_footer_branch
      %19 = sbr.rel target = $region3
    $region8: #{tpu_custom_call.1} parent=1 // loop_exit
      _
    %1016 = vsyncpa [#allocation5], 1
    %s1017 = scalar_lea.sflag [#allocation5], 1
    %1018 = vsyncpa %s1017, 1

</llo_original>
